<compile_context>
chip_gen: v6e
topology: v6e:2x2x1
jax: 0.10.0
libtpu: 0.0.40
codegen_flags: <defaults>
</compile_context>

<pallas_src>
import jax
import jax.numpy as jnp
from jax.experimental import pallas as pl
from jax.experimental.pallas import tpu as pltpu

EPS = 1e-5
LANE = 128


def _round_up(x, m):
    return (x + m - 1) // m * m


# ---------------------------------------------------------------- kernel bodies
def _reflect_pad_hw(h):
    """ReflectionPad2d(1) on a (H, W, Cp) activation (any dtype)."""
    H, W = h.shape[0], h.shape[1]
    hp = jnp.concatenate([h[1:2], h, h[H - 2:H - 1]], axis=0)
    hp = jnp.concatenate([hp[:, 1:2], hp, hp[:, W - 2:W - 1]], axis=1)
    return hp                                              # (H+2, W+2, Cp)


def _conv3x3(hp, w_ref, H, W):
    """hp: (H+2, W+2, Cp) bf16 padded activations; w_ref: (3, 3*Cp, Cp) bf16.
    Three accumulated MXU dots (K = 3*Cp each) with a f32 accumulator instead
    of one K = 9*Cp dot -> 3x smaller patch transient, K still >= 384."""
    Cp = hp.shape[-1]
    acc = None
    for dy in range(3):                                    # static unroll
        rows = hp[dy:dy + H]                               # (H, W+2, Cp)
        patch = jnp.concatenate(
            [rows[:, dx:dx + W, :] for dx in range(3)],
            axis=-1).reshape(H * W, 3 * Cp).astype(jnp.bfloat16)
        part = jnp.dot(patch, w_ref[dy], preferred_element_type=jnp.float32)
        acc = part if acc is None else acc + part
    # TODO(synk): replace the concat/unaligned window slices with an
    # 8-sublane-aligned VMEM halo scratch to cut vld/vst relayout traffic.
    return acc                                             # (H*W, Cp) f32


def _emit(y, y_ref, stats_ref, H, W, Cp):
    # y is the f32 accumulator; downcast only for the HBM store, stats stay f32.
    y_ref[0] = y.reshape(H, W, Cp).astype(y_ref.dtype)
    stats_ref[0] = jnp.concatenate(
        [jnp.sum(y, axis=0, keepdims=True),                # per-channel sum
         jnp.sum(y * y, axis=0, keepdims=True)],           # per-channel sum sq
        axis=0)                                            # (2, Cp) f32


def conv1_kernel(x_ref, w_ref, y_ref, stats_ref):
    # x_ref: (1, H, W, Cp) bf16 channel-padded input; reflect-pad done in-kernel
    _, H, W, Cp = y_ref.shape
    hp = _reflect_pad_hw(x_ref[0])
    y = _conv3x3(hp, w_ref, H, W)
    _emit(y, y_ref, stats_ref, H, W, Cp)


def bn_relu_conv2_kernel(y1_ref, sc_ref, sh_ref, w_ref, y_ref, stats_ref):
    # fused BN1 (precomputed scale/shift FMA, f32) + ReLU + reflect-pad + conv2
    _, H, W, Cp = y_ref.shape
    h = jnp.maximum(
        y1_ref[0].astype(jnp.float32) * sc_ref[...].reshape(1, 1, Cp)
        + sh_ref[...].reshape(1, 1, Cp), 0.0).astype(jnp.bfloat16)
    hp = _reflect_pad_hw(h)
    y = _conv3x3(hp, w_ref, H, W)
    _emit(y, y_ref, stats_ref, H, W, Cp)


def bn2_residual_kernel(x_ref, y2_ref, sc_ref, sh_ref, o_ref):
    # x_ref: (1, H, W, C) f32 original input; y2_ref: (1, H, W, Cp) bf16.
    # Emits the un-padded (H, W, C) result directly (no wrapper de-pad pass).
    C = o_ref.shape[-1]
    h = (y2_ref[0].astype(jnp.float32) * sc_ref[...].reshape(1, 1, -1)
         + sh_ref[...].reshape(1, 1, -1))
    o_ref[0] = x_ref[0] + h[:, :, :C]


# ------------------------------------------------------------------- wrapper
def _scale_shift(stats, gamma, beta, count):
    # stats: (N, 2, Cp) per-image partial sums (f32).  Fold BN into one FMA.
    # NOTE: single-pass E[y^2]-E[y]^2 variance; fine at these scales.
    s = jnp.sum(stats[:, 0, :], axis=0)
    ss = jnp.sum(stats[:, 1, :], axis=0)
    mean = s / count
    var = ss / count - mean * mean
    scale = gamma * jax.lax.rsqrt(var + EPS)
    shift = beta - mean * scale
    return scale.reshape(1, -1), shift.reshape(1, -1)


def resnet_block(x_nchw, w1_oihw, w2_oihw, g1, b1, g2, b2):
    """x_nchw: (N, C, H, W) float32.  Conv weights in PyTorch OIHW layout."""
    N, C, H, W = x_nchw.shape
    assert H >= 2 and W >= 2, "ReflectionPad2d(1) needs H, W >= 2"
    Cp = _round_up(C, LANE)                        # lane-dense channel axis

    # NCHW -> NHWC; f32 copy kept for the residual, bf16 channel-padded copy
    # feeds the first conv (halves its HBM read).  No HBM reflect-pad anymore.
    x_nhwc = jnp.transpose(x_nchw, (0, 2, 3, 1)).astype(jnp.float32)
    x_p = jnp.pad(x_nhwc, ((0, 0), (0, 0), (0, 0), (0, Cp - C))
                  ).astype(jnp.bfloat16)

    def prep_w(w):
        # OIHW -> (ky, kx, cin, cout) -> zero-pad channels -> (3, 3*Cp, Cp) bf16
        # (per-ky K=3*Cp matrices, cast once so the weight DMA is bf16 too).
        w = jnp.transpose(w, (2, 3, 1, 0)).astype(jnp.float32)
        w = jnp.pad(w, ((0, 0), (0, 0), (0, Cp - C), (0, Cp - C)))
        return w.reshape(3, 3 * Cp, Cp).astype(jnp.bfloat16)

    w1 = prep_w(w1_oihw)
    w2 = prep_w(w2_oihw)
    g1p = jnp.pad(g1.astype(jnp.float32), (0, Cp - C))
    b1p = jnp.pad(b1.astype(jnp.float32), (0, Cp - C))
    g2p = jnp.pad(g2.astype(jnp.float32), (0, Cp - C))
    b2p = jnp.pad(b2.astype(jnp.float32), (0, Cp - C))

    parallel = pltpu.CompilerParams(dimension_semantics=("parallel",))
    img_spec_p = pl.BlockSpec((1, H, W, Cp), lambda n: (n, 0, 0, 0))
    img_spec_c = pl.BlockSpec((1, H, W, C), lambda n: (n, 0, 0, 0))
    vec_spec = pl.BlockSpec((1, Cp), lambda n: (0, 0))
    w_spec = pl.BlockSpec((3, 3 * Cp, Cp), lambda n: (0, 0, 0))
    stats_spec = pl.BlockSpec((1, 2, Cp), lambda n: (n, 0, 0))
    # TODO(synk): for large H/W add an H-strip grid axis ("arbitrary", 1-row
    # halo, @pl.when stats init) so the grid is long enough to hide DMA and
    # per-step VMEM stays bounded; and single-buffer the constant w/vec specs
    # via pipeline_mode=pl.Buffered(1).  Whole-image blocks are fine here.

    # ---- pass 1: in-kernel reflect-pad + conv1 + per-image stats -------------
    y1, stats1 = pl.pallas_call(
        conv1_kernel,
        grid=(N,),
        in_specs=[img_spec_p, w_spec],
        out_specs=(img_spec_p, stats_spec),
        out_shape=(jax.ShapeDtypeStruct((N, H, W, Cp), jnp.bfloat16),
                   jax.ShapeDtypeStruct((N, 2, Cp), jnp.float32)),
        compiler_params=parallel,
    )(x_p, w1)

    count = N * H * W
    sc1, sh1 = _scale_shift(stats1, g1p, b1p, count)

    # ---- pass 2: BN1 + ReLU + reflect-pad + conv2 + stats --------------------
    y2, stats2 = pl.pallas_call(
        bn_relu_conv2_kernel,
        grid=(N,),
        in_specs=[img_spec_p, vec_spec, vec_spec, w_spec],
        out_specs=(img_spec_p, stats_spec),
        out_shape=(jax.ShapeDtypeStruct((N, H, W, Cp), jnp.bfloat16),
                   jax.ShapeDtypeStruct((N, 2, Cp), jnp.float32)),
        compiler_params=parallel,
    )(y1, sc1, sh1, w2)

    sc2, sh2 = _scale_shift(stats2, g2p, b2p, count)

    # ---- pass 3: BN2 + residual add, emitted at real channel count -----------
    out_nhwc = pl.pallas_call(
        bn2_residual_kernel,
        grid=(N,),
        in_specs=[img_spec_c, img_spec_p, vec_spec, vec_spec],
        out_specs=img_spec_c,
        out_shape=jax.ShapeDtypeStruct((N, H, W, C), jnp.float32),
        compiler_params=parallel,
    )(x_nhwc, y2, sc2, sh2)

    return jnp.transpose(out_nhwc, (0, 3, 1, 2))   # small NHWC->NCHW transpose


# -------------------------------------------------------- pure-JAX reference
def _reference(x_nchw, w1_oihw, w2_oihw, g1, b1, g2, b2):
    def bn(y, g, b):
        m = jnp.mean(y, axis=(0, 2, 3), keepdims=True)
        v = jnp.mean((y - m) ** 2, axis=(0, 2, 3), keepdims=True)
        return (y - m) * jax.lax.rsqrt(v + EPS) * g.reshape(1, -1, 1, 1) \
               + b.reshape(1, -1, 1, 1)

    def conv(y, w):
        yp = jnp.pad(y, ((0, 0), (0, 0), (1, 1), (1, 1)), mode="reflect")
        return jax.lax.conv_general_dilated(
            yp, w, window_strides=(1, 1), padding="VALID",
            dimension_numbers=("NCHW", "OIHW", "NCHW"))

    h = jnp.maximum(bn(conv(x_nchw, w1_oihw), g1, b1), 0.0)
    h = bn(conv(h, w2_oihw), g2, b2)
    return x_nchw + h


# ----------------------------------------------------------------------- main
if __name__ == "__main__":
    N, C, H, W = 2, 4, 16, 16
    key = jax.random.PRNGKey(0)
    kx, kw1, kw2, kg1, kb1, kg2, kb2 = jax.random.split(key, 7)

    x = jax.random.normal(kx, (N, C, H, W), jnp.float32)
    # Conv2d(dim, dim, 3, bias=False) weights, PyTorch OIHW layout
    w1 = jax.random.normal(kw1, (C, C, 3, 3), jnp.float32) * 0.1
    w2 = jax.random.normal(kw2, (C, C, 3, 3), jnp.float32) * 0.1
    # BatchNorm2d affine params (random deterministic to exercise affine path)
    g1 = 1.0 + 0.1 * jax.random.normal(kg1, (C,), jnp.float32)
    b1 = 0.1 * jax.random.normal(kb1, (C,), jnp.float32)
    g2 = 1.0 + 0.1 * jax.random.normal(kg2, (C,), jnp.float32)
    b2 = 0.1 * jax.random.normal(kb2, (C,), jnp.float32)

    out = jax.block_until_ready(resnet_block(x, w1, w2, g1, b1, g2, b2))
    ref = _reference(x, w1, w2, g1, b1, g2, b2)
    assert out.shape == (N, C, H, W)
    # Tolerance loosened vs. the f32 reference because MXU operands and the
    # inter-pass activations are bf16 (BN statistics stay f32).
    assert jnp.allclose(out, ref, atol=1e-1, rtol=1e-1), "mismatch vs reference"

    print("KERNEL_OK")
</pallas_src>

<mosaic_0001>
module attributes {stable_mosaic.version = 11 : i64} {
  func.func @conv1_kernel(%arg0: i32, %arg1: memref<1x16x16x128xbf16, #tpu.memory_space<vmem>>, %arg2: memref<3x384x128xbf16, #tpu.memory_space<vmem>>, %arg3: memref<1x16x16x128xbf16, #tpu.memory_space<vmem>>, %arg4: memref<1x2x128xf32, #tpu.memory_space<vmem>>) attributes {dimension_semantics = [#tpu.dimension_semantics<parallel>], iteration_bounds = array<i64: 2>, scalar_prefetch = 0 : i64, scratch_operands = 0 : i64, tpu.core_type = #tpu.core_type<tc>, window_params = [{transform_indices = @transform_0, window_bounds = array<i64: 1, 16, 16, 128>}, {pipeline_mode = #tpu.pipeline_mode<synchronous>, transform_indices = @transform_1, window_bounds = array<i64: 3, 384, 128>}, {transform_indices = @transform_2, window_bounds = array<i64: 1, 16, 16, 128>}, {transform_indices = @transform_3, window_bounds = array<i64: 1, 2, 128>}]} {
    %c0 = arith.constant 0 : index
    %c0_0 = arith.constant 0 : index
    %c0_1 = arith.constant 0 : index
    %c0_2 = arith.constant 0 : index
    %0 = vector.load %arg1[%c0, %c0_0, %c0_1, %c0_2] : memref<1x16x16x128xbf16, #tpu.memory_space<vmem>>, vector<1x16x16x128xbf16>
    %1 = vector.shape_cast %0 : vector<1x16x16x128xbf16> to vector<16x16x128xbf16>
    %2 = vector.extract_strided_slice %1 {offsets = [1, 0, 0], sizes = [1, 16, 128], strides = [1, 1, 1]} : vector<16x16x128xbf16> to vector<1x16x128xbf16>
    %3 = vector.extract_strided_slice %1 {offsets = [14, 0, 0], sizes = [1, 16, 128], strides = [1, 1, 1]} : vector<16x16x128xbf16> to vector<1x16x128xbf16>
    %4 = tpu.concatenate %2, %1, %3 in 0 : vector<1x16x128xbf16>, vector<16x16x128xbf16>, vector<1x16x128xbf16> -> vector<18x16x128xbf16>
    %5 = vector.extract_strided_slice %4 {offsets = [0, 1, 0], sizes = [18, 1, 128], strides = [1, 1, 1]} : vector<18x16x128xbf16> to vector<18x1x128xbf16>
    %6 = vector.extract_strided_slice %4 {offsets = [0, 14, 0], sizes = [18, 1, 128], strides = [1, 1, 1]} : vector<18x16x128xbf16> to vector<18x1x128xbf16>
    %7 = tpu.concatenate %5, %4, %6 in 1 : vector<18x1x128xbf16>, vector<18x16x128xbf16>, vector<18x1x128xbf16> -> vector<18x18x128xbf16>
    %8 = vector.extract_strided_slice %7 {offsets = [0, 0, 0], sizes = [16, 18, 128], strides = [1, 1, 1]} : vector<18x18x128xbf16> to vector<16x18x128xbf16>
    %9 = vector.extract_strided_slice %8 {offsets = [0, 0, 0], sizes = [16, 16, 128], strides = [1, 1, 1]} : vector<16x18x128xbf16> to vector<16x16x128xbf16>
    %10 = vector.extract_strided_slice %8 {offsets = [0, 1, 0], sizes = [16, 16, 128], strides = [1, 1, 1]} : vector<16x18x128xbf16> to vector<16x16x128xbf16>
    %11 = vector.extract_strided_slice %8 {offsets = [0, 2, 0], sizes = [16, 16, 128], strides = [1, 1, 1]} : vector<16x18x128xbf16> to vector<16x16x128xbf16>
    %12 = tpu.concatenate %9, %10, %11 in 2 : vector<16x16x128xbf16>, vector<16x16x128xbf16>, vector<16x16x128xbf16> -> vector<16x16x384xbf16>
    %13 = vector.shape_cast %12 : vector<16x16x384xbf16> to vector<256x384xbf16>
    %c0_3 = arith.constant 0 : index
    %c0_4 = arith.constant 0 : index
    %c0_5 = arith.constant 0 : index
    %14 = vector.load %arg2[%c0_3, %c0_4, %c0_5] : memref<3x384x128xbf16, #tpu.memory_space<vmem>>, vector<1x384x128xbf16>
    %15 = vector.shape_cast %14 : vector<1x384x128xbf16> to vector<384x128xbf16>
    %cst = arith.constant dense<0.000000e+00> : vector<256x128xf32>
    %16 = tpu.matmul %13, %15, %cst {dimension_numbers = #tpu.dot_dimension_numbers<[1], [0], [0], [1], [0, 0, 1, 1], [], []>} : vector<256x384xbf16>, vector<384x128xbf16>, vector<256x128xf32> -> vector<256x128xf32>
    %17 = vector.extract_strided_slice %7 {offsets = [1, 0, 0], sizes = [16, 18, 128], strides = [1, 1, 1]} : vector<18x18x128xbf16> to vector<16x18x128xbf16>
    %18 = vector.extract_strided_slice %17 {offsets = [0, 0, 0], sizes = [16, 16, 128], strides = [1, 1, 1]} : vector<16x18x128xbf16> to vector<16x16x128xbf16>
    %19 = vector.extract_strided_slice %17 {offsets = [0, 1, 0], sizes = [16, 16, 128], strides = [1, 1, 1]} : vector<16x18x128xbf16> to vector<16x16x128xbf16>
    %20 = vector.extract_strided_slice %17 {offsets = [0, 2, 0], sizes = [16, 16, 128], strides = [1, 1, 1]} : vector<16x18x128xbf16> to vector<16x16x128xbf16>
    %21 = tpu.concatenate %18, %19, %20 in 2 : vector<16x16x128xbf16>, vector<16x16x128xbf16>, vector<16x16x128xbf16> -> vector<16x16x384xbf16>
    %22 = vector.shape_cast %21 : vector<16x16x384xbf16> to vector<256x384xbf16>
    %c1 = arith.constant 1 : index
    %c0_6 = arith.constant 0 : index
    %c0_7 = arith.constant 0 : index
    %23 = vector.load %arg2[%c1, %c0_6, %c0_7] : memref<3x384x128xbf16, #tpu.memory_space<vmem>>, vector<1x384x128xbf16>
    %24 = vector.shape_cast %23 : vector<1x384x128xbf16> to vector<384x128xbf16>
    %cst_8 = arith.constant dense<0.000000e+00> : vector<256x128xf32>
    %25 = tpu.matmul %22, %24, %cst_8 {dimension_numbers = #tpu.dot_dimension_numbers<[1], [0], [0], [1], [0, 0, 1, 1], [], []>} : vector<256x384xbf16>, vector<384x128xbf16>, vector<256x128xf32> -> vector<256x128xf32>
    %26 = arith.addf %16, %25 : vector<256x128xf32>
    %27 = vector.extract_strided_slice %7 {offsets = [2, 0, 0], sizes = [16, 18, 128], strides = [1, 1, 1]} : vector<18x18x128xbf16> to vector<16x18x128xbf16>
    %28 = vector.extract_strided_slice %27 {offsets = [0, 0, 0], sizes = [16, 16, 128], strides = [1, 1, 1]} : vector<16x18x128xbf16> to vector<16x16x128xbf16>
    %29 = vector.extract_strided_slice %27 {offsets = [0, 1, 0], sizes = [16, 16, 128], strides = [1, 1, 1]} : vector<16x18x128xbf16> to vector<16x16x128xbf16>
    %30 = vector.extract_strided_slice %27 {offsets = [0, 2, 0], sizes = [16, 16, 128], strides = [1, 1, 1]} : vector<16x18x128xbf16> to vector<16x16x128xbf16>
    %31 = tpu.concatenate %28, %29, %30 in 2 : vector<16x16x128xbf16>, vector<16x16x128xbf16>, vector<16x16x128xbf16> -> vector<16x16x384xbf16>
    %32 = vector.shape_cast %31 : vector<16x16x384xbf16> to vector<256x384xbf16>
    %c2 = arith.constant 2 : index
    %c0_9 = arith.constant 0 : index
    %c0_10 = arith.constant 0 : index
    %33 = vector.load %arg2[%c2, %c0_9, %c0_10] : memref<3x384x128xbf16, #tpu.memory_space<vmem>>, vector<1x384x128xbf16>
    %34 = vector.shape_cast %33 : vector<1x384x128xbf16> to vector<384x128xbf16>
    %cst_11 = arith.constant dense<0.000000e+00> : vector<256x128xf32>
    %35 = tpu.matmul %32, %34, %cst_11 {dimension_numbers = #tpu.dot_dimension_numbers<[1], [0], [0], [1], [0, 0, 1, 1], [], []>} : vector<256x384xbf16>, vector<384x128xbf16>, vector<256x128xf32> -> vector<256x128xf32>
    %36 = arith.addf %26, %35 : vector<256x128xf32>
    %37 = vector.shape_cast %36 : vector<256x128xf32> to vector<16x16x128xf32>
    %38 = arith.truncf %37 : vector<16x16x128xf32> to vector<16x16x128xbf16>
    %c0_12 = arith.constant 0 : index
    %c0_13 = arith.constant 0 : index
    %c0_14 = arith.constant 0 : index
    %c0_15 = arith.constant 0 : index
    %39 = vector.load %arg3[%c0_12, %c0_13, %c0_14, %c0_15] : memref<1x16x16x128xbf16, #tpu.memory_space<vmem>>, vector<1x16x16x128xbf16>
    %40 = vector.shape_cast %39 : vector<1x16x16x128xbf16> to vector<16x16x128xbf16>
    %41 = vector.shape_cast %38 : vector<16x16x128xbf16> to vector<1x16x16x128xbf16>
    tpu.vector_store %arg3[%c0_12, %c0_13, %c0_14, %c0_15], %41 {strides = array<i32>} : memref<1x16x16x128xbf16, #tpu.memory_space<vmem>>, vector<1x16x16x128xbf16>,
    %cst_16 = arith.constant dense<0.000000e+00> : vector<128xf32>
    %42 = vector.multi_reduction <add>, %36, %cst_16 [0] : vector<256x128xf32> to vector<128xf32>
    %43 = vector.shape_cast %42 : vector<128xf32> to vector<1x128xf32>
    %44 = arith.mulf %36, %36 : vector<256x128xf32>
    %cst_17 = arith.constant dense<0.000000e+00> : vector<128xf32>
    %45 = vector.multi_reduction <add>, %44, %cst_17 [0] : vector<256x128xf32> to vector<128xf32>
    %46 = vector.shape_cast %45 : vector<128xf32> to vector<1x128xf32>
    %47 = tpu.concatenate %43, %46 in 0 : vector<1x128xf32>, vector<1x128xf32> -> vector<2x128xf32>
    %c0_18 = arith.constant 0 : index
    %c0_19 = arith.constant 0 : index
    %c0_20 = arith.constant 0 : index
    %48 = vector.load %arg4[%c0_18, %c0_19, %c0_20] : memref<1x2x128xf32, #tpu.memory_space<vmem>>, vector<1x2x128xf32>
    %49 = vector.shape_cast %48 : vector<1x2x128xf32> to vector<2x128xf32>
    %50 = vector.shape_cast %47 : vector<2x128xf32> to vector<1x2x128xf32>
    tpu.vector_store %arg4[%c0_18, %c0_19, %c0_20], %50 {strides = array<i32>} : memref<1x2x128xf32, #tpu.memory_space<vmem>>, vector<1x2x128xf32>,
    return
  }
  func.func @transform_0(%arg0: i32) -> (i32, i32, i32, i32) {
    %c0_i32 = arith.constant 0 : i32
    %c0_i32_0 = arith.constant 0 : i32
    %c0_i32_1 = arith.constant 0 : i32
    %c0_i32_2 = arith.constant 0 : i32
    return %arg0, %c0_i32, %c0_i32_0, %c0_i32_1 : i32, i32, i32, i32
  }
  func.func @transform_1(%arg0: i32) -> (i32, i32, i32) {
    %c0_i32 = arith.constant 0 : i32
    %c0_i32_0 = arith.constant 0 : i32
    %c0_i32_1 = arith.constant 0 : i32
    %c0_i32_2 = arith.constant 0 : i32
    return %c0_i32, %c0_i32_0, %c0_i32_1 : i32, i32, i32
  }
  func.func @transform_2(%arg0: i32) -> (i32, i32, i32, i32) {
    %c0_i32 = arith.constant 0 : i32
    %c0_i32_0 = arith.constant 0 : i32
    %c0_i32_1 = arith.constant 0 : i32
    %c0_i32_2 = arith.constant 0 : i32
    return %arg0, %c0_i32, %c0_i32_0, %c0_i32_1 : i32, i32, i32, i32
  }
  func.func @transform_3(%arg0: i32) -> (i32, i32, i32) {
    %c0_i32 = arith.constant 0 : i32
    %c0_i32_0 = arith.constant 0 : i32
    %c0_i32_1 = arith.constant 0 : i32
    return %arg0, %c0_i32, %c0_i32_0 : i32, i32, i32
  }
}

</mosaic_0001>

<llo_original>
// kernel: tpu_custom_call.1
$region0: #{tpu_custom_call.1}
  #allocation0 [shape = 'u32[]', space=smem, size = 0x4, offset = 0x4, fixed_abs, tag = 'smem constant byte address 0x4 - core index']
  #allocation1 [shape = 'u32[144,128]{1,0:T(1,128)}', space=vmem, size = 0x12000, scoped, tag = 'internal scratch']
  %s0 = inlined_call_operand.hbm [shape: bf16[2,16,16,128], index: 0, kind: input, shape index: {}]
  %s1 = inlined_call_operand.hbm [shape: bf16[3,384,128], index: 1, kind: input, shape index: {}]
  %s2 = inlined_call_operand.hbm [shape: bf16[2,16,16,128], index: 2, kind: output, shape index: {0}]
  %s3 = inlined_call_operand.hbm [shape: f32[2,2,128], index: 3, kind: output, shape index: {1}]
  %4 = xla_tuple %s2, %s3
  %s5 = sld [smem:[#allocation0]]
  $region57: #{tpu_custom_call.1} parent=0
    _
  %s7 = ssub.s32 1, %s5
  %s8 = scalar_select 0, %s7, %s5
  $region1: #{tpu_custom_call.1} parent=0
    #allocation2 [shape = 'u8[131072]{0}', space=vmem, size = 0x20000, scoped, tag = 'input window, operand 0']
    #allocation3 [shape = 's32[2]{0}', space=sflag, size = 0x8, scoped, tag = 'scoped memory for tpu_custom_call.1']
    #allocation4 [shape = 's32[2]{0}', space=sflag, size = 0x8, scoped, tag = 'scoped memory for tpu_custom_call.1']
    #allocation5 [shape = 'u8[294912]{0}', space=vmem, size = 0x48000, scoped, tag = 'input window, operand 1, single buffered']
    #allocation6 [shape = 's32[1]{0}', space=sflag, size = 0x4, scoped, tag = 'scoped memory for tpu_custom_call.1']
    #allocation7 [shape = 'u8[131072]{0}', space=vmem, size = 0x20000, scoped, tag = 'output window, operand 0']
    #allocation8 [shape = 'u8[2048]{0}', space=vmem, size = 0x800, scoped, tag = 'output window, operand 1']
    #allocation9 [shape = 's32[2]{0}', space=sflag, size = 0x8, scoped, tag = 'scoped memory for tpu_custom_call.1']
    %9 = vsyncpa [#allocation3], 0
    %s10 = scalar_lea.sflag [#allocation3], 1
    %11 = vsyncpa %s10, 0
    %12 = vsyncpa [#allocation6], 0
    %13 = vsyncpa [#allocation4], 0
    %s14 = scalar_lea.sflag [#allocation4], 1
    %15 = vsyncpa %s14, 0
    %16 = vsyncpa [#allocation9], 0
    %s17 = scalar_lea.sflag [#allocation9], 1
    %18 = vsyncpa %s17, 0
    loop: start=0, step=1, limit=4
    $region2: #{tpu_custom_call.1} parent=1 // loop_pre_header
      _
    $region3: #{tpu_custom_call.1} parent=1 // loop_header
      %s20 = sphi 0, %s24
      %p21 = scmp.ge.s32.totalorder %s20, 4
      %s30 = sphi 0, %s32
      %s33 = sphi 0, %s30
      %s34 = sphi 0, %s33
      %s50 = sphi 0, %s34
      %s54 = sphi 0, %s54
      %s56 = sphi 0, %s54
      %s57 = sphi 0, %s56
      %s71 = sphi 0, %s57
      %s77 = sphi 0, %s79
      %s80 = sphi 0, %s77
      %s81 = sphi 0, %s80
      %s97 = sphi 0, %s81
      %s103 = sphi 0, %s105
      %s106 = sphi 0, %s103
      %s107 = sphi 0, %s106
      %s123 = sphi 0, %s107
    $region4: #{tpu_custom_call.1} parent=1 // loop_header_branch
      %23 = sbr.rel (%p21) target = $region8
    $region5: #{tpu_custom_call.1} parent=1 // loop_body
      %s25 = ssub.s32 %s20, 1
      %s26 = ssub.s32 %s20, 2
      %s27 = sadd.s32 %s20, 1
      %s28 = ssub.s32 %s20, %s27
      %p29 = scmp.eq.s32.totalorder %s28, 0
      %s31 = sadd.s32 %s30, 1
      %s32 = scalar_select %p29, %s30, %s31
      %p35 = pneg %p29
      %p36 = scmp.eq.s32.totalorder %s20, 1
      %p37 = por %p35, %p36
      %p38 = scmp.ne.s32.totalorder %s30, %s33
      %p39 = scmp.eq.s32.totalorder %s20, 0
      %p40 = por %p38, %p39
      %p41 = scmp.ne.s32.totalorder %s30, %s33
      %p42 = scmp.eq.s32.totalorder %s25, 1
      %p43 = por %p41, %p42
      %p44 = scmp.ne.s32.totalorder %s33, %s34
      %p45 = scmp.eq.s32.totalorder %s25, 0
      %p46 = por %p44, %p45
      %p47 = scmp.ne.s32.totalorder %s33, %s34
      %p48 = scmp.eq.s32.totalorder %s26, 1
      %p49 = por %p47, %p48
      %p51 = scmp.ne.s32.totalorder %s34, %s50
      %p52 = scmp.eq.s32.totalorder %s26, 0
      %p53 = por %p51, %p52
      %s55 = sadd.s32 %s54, 1
      %p58 = scmp.eq.s32.totalorder %s20, 1
      %p59 = scmp.ne.s32.totalorder %s54, %s56
      %p60 = scmp.eq.s32.totalorder %s20, 0
      %p61 = por %p59, %p60
      %p62 = scmp.ne.s32.totalorder %s54, %s56
      %p63 = scmp.eq.s32.totalorder %s25, 1
      %p64 = por %p62, %p63
      %p65 = scmp.ne.s32.totalorder %s56, %s57
      %p66 = scmp.eq.s32.totalorder %s25, 0
      %p67 = por %p65, %p66
      %p68 = scmp.ne.s32.totalorder %s56, %s57
      %p69 = scmp.eq.s32.totalorder %s26, 1
      %p70 = por %p68, %p69
      %p72 = scmp.ne.s32.totalorder %s57, %s71
      %p73 = scmp.eq.s32.totalorder %s26, 0
      %p74 = por %p72, %p73
      %s75 = ssub.s32 %s20, %s27
      %p76 = scmp.eq.s32.totalorder %s75, 0
      %s78 = sadd.s32 %s77, 1
      %s79 = scalar_select %p76, %s77, %s78
      %p82 = pneg %p76
      %p83 = scmp.eq.s32.totalorder %s20, 1
      %p84 = por %p82, %p83
      %p85 = scmp.ne.s32.totalorder %s77, %s80
      %p86 = scmp.eq.s32.totalorder %s20, 0
      %p87 = por %p85, %p86
      %p88 = scmp.ne.s32.totalorder %s77, %s80
      %p89 = scmp.eq.s32.totalorder %s25, 1
      %p90 = por %p88, %p89
      %p91 = scmp.ne.s32.totalorder %s80, %s81
      %p92 = scmp.eq.s32.totalorder %s25, 0
      %p93 = por %p91, %p92
      %p94 = scmp.ne.s32.totalorder %s80, %s81
      %p95 = scmp.eq.s32.totalorder %s26, 1
      %p96 = por %p94, %p95
      %p98 = scmp.ne.s32.totalorder %s81, %s97
      %p99 = scmp.eq.s32.totalorder %s26, 0
      %p100 = por %p98, %p99
      %s101 = ssub.s32 %s20, %s27
      %p102 = scmp.eq.s32.totalorder %s101, 0
      %s104 = sadd.s32 %s103, 1
      %s105 = scalar_select %p102, %s103, %s104
      %p108 = pneg %p102
      %p109 = scmp.eq.s32.totalorder %s20, 1
      %p110 = por %p108, %p109
      %p111 = scmp.ne.s32.totalorder %s103, %s106
      %p112 = scmp.eq.s32.totalorder %s20, 0
      %p113 = por %p111, %p112
      %p114 = scmp.ne.s32.totalorder %s103, %s106
      %p115 = scmp.eq.s32.totalorder %s25, 1
      %p116 = por %p114, %p115
      %p117 = scmp.ne.s32.totalorder %s106, %s107
      %p118 = scmp.eq.s32.totalorder %s25, 0
      %p119 = por %p117, %p118
      %p120 = scmp.ne.s32.totalorder %s106, %s107
      %p121 = scmp.eq.s32.totalorder %s26, 1
      %p122 = por %p120, %p121
      %p124 = scmp.ne.s32.totalorder %s107, %s123
      %p125 = scmp.eq.s32.totalorder %s26, 0
      %p126 = por %p124, %p125
      %p127 = scmp.le.s32.totalorder 1, %s20
      %p128 = scmp.lt.s32.totalorder %s20, 3
      %p129 = pnand %p127, %p128
      %p130 = pneg %p129
      // Predicated region
      $region9: #{tpu_custom_call.1} parent=5 // pred_check
        _
      $region10: #{tpu_custom_call.1} parent=5 // pred_check_branch
        %132 = sbr.rel (%p129) target = $region12
      $region11: #{tpu_custom_call.1} parent=5 // pred_region
        %s133 = ssub.s32 %s20, 1
        // Predicated region
        $region13: #{tpu_custom_call.1} parent=11 // pred_check
          %p134 = pneg %p67
        $region14: #{tpu_custom_call.1} parent=11 // pred_check_branch
          %136 = sbr.rel (%p134) target = $region16
        $region15: #{tpu_custom_call.1} parent=11 // pred_region
          %s138 = ssub.s32 9216, 9216
          %139 = vsyncadd [#allocation6], %s138
          %s140 = sshll.u32 [#allocation5], 4
          %s141 = int_to_ptr.vmem [resolvable:$true] %s140
          %146 = dma.hbm_to_vmem [thread:$0]  %s1, 9216, %s141, [#allocation6], 64, 64, 4
        $region16: #{tpu_custom_call.1} parent=11 // pred_fallthru
          _
      $region12: #{tpu_custom_call.1} parent=5 // pred_fallthru
        _
      %p147 = scmp.lt.s32.totalorder %s20, 2
      // Predicated region
      $region17: #{tpu_custom_call.1} parent=5 // pred_check
        %p148 = pneg %p147
      $region18: #{tpu_custom_call.1} parent=5 // pred_check_branch
        %150 = sbr.rel (%p148) target = $region20
      $region19: #{tpu_custom_call.1} parent=5 // pred_region
        // Predicated region
        $region21: #{tpu_custom_call.1} parent=19 // pred_check
          %p151 = pneg %p40
        $region22: #{tpu_custom_call.1} parent=19 // pred_check_branch
          %153 = sbr.rel (%p151) target = $region24
        $region23: #{tpu_custom_call.1} parent=19 // pred_region
          %s154 = sand.u32 %s30, 1
          %s155 = scalar_lea.sflag [#allocation3], %s154
          %s156 = sand.u32 %s30, 1
          %s157 = smul.addr %s156, 128
          %s158 = scalar_lea.vmem [#allocation2], %s157
          %s160 = ssub.s32 2048, 2048
          %161 = vsyncadd %s155, %s160
          %s162 = smul.addr %s20, 32
          %s163 = smul.addr %s162, 64
          %s164 = scalar_lea.hbm %s0, %s163
          %s165 = sshll.u32 %s158, 4
          %s166 = int_to_ptr.vmem [resolvable:$true] %s165
          %171 = dma.hbm_to_vmem [thread:$0]  %s164, 2048, %s166, %s155, 64, 64, 4
        $region24: #{tpu_custom_call.1} parent=19 // pred_fallthru
          _
      $region20: #{tpu_custom_call.1} parent=5 // pred_fallthru
        _
      %p172 = scmp.le.s32.totalorder 1, %s20
      %p173 = scmp.lt.s32.totalorder %s20, 3
      %p174 = pnand %p172, %p173
      %p175 = pneg %p174
      // Predicated region
      $region25: #{tpu_custom_call.1} parent=5 // pred_check
        _
      $region26: #{tpu_custom_call.1} parent=5 // pred_check_branch
        %177 = sbr.rel (%p174) target = $region28
      $region27: #{tpu_custom_call.1} parent=5 // pred_region
        %s178 = ssub.s32 %s20, 1
        %s179 = sand.u32 %s33, 1
        %s180 = scalar_lea.sflag [#allocation3], %s179
        %s181 = sand.u32 %s33, 1
        %s182 = smul.addr %s181, 128
        %s183 = scalar_lea.vmem [#allocation2], %s182
        // Predicated region
        $region29: #{tpu_custom_call.1} parent=27 // pred_check
          %p184 = pneg %p46
        $region30: #{tpu_custom_call.1} parent=27 // pred_check_branch
          %186 = sbr.rel (%p184) target = $region32
        $region31: #{tpu_custom_call.1} parent=27 // pred_region
          %187 = dma.done %s180, 2048
        $region32: #{tpu_custom_call.1} parent=27 // pred_fallthru
          _
        // Predicated region
        $region33: #{tpu_custom_call.1} parent=27 // pred_check
          %p188 = pneg %p67
        $region34: #{tpu_custom_call.1} parent=27 // pred_check_branch
          %190 = sbr.rel (%p188) target = $region36
        $region35: #{tpu_custom_call.1} parent=27 // pred_region
          %191 = dma.done [#allocation6], 9216
        $region36: #{tpu_custom_call.1} parent=27 // pred_fallthru
          _
        %s192 = sand.u32 %s33, 1
        %s193 = scalar_lea.sflag [#allocation3], %s192
        %s194 = sand.u32 %s33, 1
        %s195 = smul.addr %s194, 128
        %s196 = scalar_lea.vmem [#allocation2], %s195
        %p197 = pneg %p46
        %p198 = pneg %p43
        %p199 = pneg %p67
        %p200 = pneg %p64
        %p201 = pneg %p93
        %p202 = pneg %p90
        %s203 = sand.u32 %s80, 1
        %s204 = scalar_lea.sflag [#allocation4], %s203
        %s205 = sand.u32 %s80, 1
        %s206 = smul.addr %s205, 128
        %s207 = scalar_lea.vmem [#allocation7], %s206
        %p208 = pneg %p119
        %p209 = pneg %p116
        %s210 = sand.u32 %s106, 1
        %s211 = scalar_lea.sflag [#allocation9], %s210
        %s212 = sand.u32 %s106, 1
        %s213 = smul.addr %s212, 2
        %s214 = scalar_lea.vmem [#allocation8], %s213
        %v216 = vld [vmem:[%s183] sm:$0xf]
        %v217 = vld [vmem:[%s183 + $0x4] sm:$0xf]
        %v218 = vld [vmem:[%s183 + $0x8] sm:$0xf]
        %v219 = vld [vmem:[%s183 + $0xc] sm:$0xf]
        %v220 = vld [vmem:[%s183 + $0x10] sm:$0xf]
        %v221 = vld [vmem:[%s183 + $0x14] sm:$0xf]
        %v222 = vld [vmem:[%s183 + $0x18] sm:$0xf]
        %v223 = vld [vmem:[%s183 + $0x1c] sm:$0xf]
        %v224 = vld [vmem:[%s183 + $0x20] sm:$0xf]
        %v225 = vld [vmem:[%s183 + $0x24] sm:$0xf]
        %v226 = vld [vmem:[%s183 + $0x28] sm:$0xf]
        %v227 = vld [vmem:[%s183 + $0x2c] sm:$0xf]
        %v228 = vld [vmem:[%s183 + $0x30] sm:$0xf]
        %v229 = vld [vmem:[%s183 + $0x34] sm:$0xf]
        %v230 = vld [vmem:[%s183 + $0x38] sm:$0xf]
        %v231 = vld [vmem:[%s183 + $0x3c] sm:$0xf]
        %v232 = vld [vmem:[%s183 + $0x40] sm:$0xf]
        %v233 = vld [vmem:[%s183 + $0x44] sm:$0xf]
        %v234 = vld [vmem:[%s183 + $0x48] sm:$0xf]
        %v235 = vld [vmem:[%s183 + $0x4c] sm:$0xf]
        %v236 = vld [vmem:[%s183 + $0x50] sm:$0xf]
        %v237 = vld [vmem:[%s183 + $0x54] sm:$0xf]
        %v238 = vld [vmem:[%s183 + $0x58] sm:$0xf]
        %v239 = vld [vmem:[%s183 + $0x5c] sm:$0xf]
        %v240 = vld [vmem:[%s183 + $0x60] sm:$0xf]
        %v241 = vld [vmem:[%s183 + $0x64] sm:$0xf]
        %v242 = vld [vmem:[%s183 + $0x68] sm:$0xf]
        %v243 = vld [vmem:[%s183 + $0x6c] sm:$0xf]
        %v244 = vld [vmem:[%s183 + $0x70] sm:$0xf]
        %v245 = vld [vmem:[%s183 + $0x74] sm:$0xf]
        %v246 = vld [vmem:[%s183 + $0x78] sm:$0xf]
        %v247 = vld [vmem:[%s183 + $0x7c] sm:$0xf]
        %v264 = vunpack.c.l.b16 %v218
        %v265 = vunpack.c.l.b16 %v216
        %v266 = vunpack.c.l.b16 %v220
        %v267 = vunpack.c.l.b16 %v222
        %v268 = vunpack.c.l.b16 %v224
        %v269 = vunpack.c.l.b16 %v226
        %v270 = vunpack.c.l.b16 %v228
        %v271 = vunpack.c.l.b16 %v230
        %v272 = vunpack.c.l.b16 %v232
        %v273 = vunpack.c.l.b16 %v234
        %v274 = vunpack.c.l.b16 %v236
        %v275 = vunpack.c.l.b16 %v238
        %v276 = vunpack.c.l.b16 %v240
        %v277 = vunpack.c.l.b16 %v242
        %v278 = vunpack.c.l.b16 %v244
        %v279 = vunpack.c.l.b16 %v246
        %v280 = vpack.c.b16 %v264, %v264
        %v281 = vpack.c.b16 %v265, %v265
        %v282 = vpack.c.b16 %v266, %v266
        %v283 = vpack.c.b16 %v267, %v267
        %v284 = vpack.c.b16 %v268, %v268
        %v285 = vpack.c.b16 %v269, %v269
        %v286 = vpack.c.b16 %v270, %v270
        %v287 = vpack.c.b16 %v271, %v271
        %v288 = vpack.c.b16 %v272, %v272
        %v289 = vpack.c.b16 %v273, %v273
        %v290 = vpack.c.b16 %v274, %v274
        %v291 = vpack.c.b16 %v275, %v275
        %v292 = vpack.c.b16 %v276, %v276
        %v293 = vpack.c.b16 %v277, %v277
        %v294 = vpack.c.b16 %v278, %v278
        %v295 = vpack.c.b16 %v279, %v279
        %v297 = vshrl.u32 %v280, 16
        %v300 = vshrl.u32 %v281, 16
        %v303 = vshrl.u32 %v282, 16
        %v306 = vshrl.u32 %v283, 16
        %v309 = vshrl.u32 %v284, 16
        %v312 = vshrl.u32 %v285, 16
        %v315 = vshrl.u32 %v286, 16
        %v318 = vshrl.u32 %v287, 16
        %v321 = vshrl.u32 %v288, 16
        %v324 = vshrl.u32 %v289, 16
        %v327 = vshrl.u32 %v290, 16
        %v330 = vshrl.u32 %v291, 16
        %v333 = vshrl.u32 %v292, 16
        %v336 = vshrl.u32 %v293, 16
        %v339 = vshrl.u32 %v294, 16
        %v342 = vshrl.u32 %v295, 16
        %v376 = vunpack.c.l.b16 %v219
        %v377 = vunpack.c.l.b16 %v217
        %v378 = vunpack.c.l.b16 %v221
        %v379 = vunpack.c.l.b16 %v223
        %v380 = vunpack.c.l.b16 %v225
        %v381 = vunpack.c.l.b16 %v227
        %v382 = vunpack.c.l.b16 %v229
        %v383 = vunpack.c.l.b16 %v231
        %v384 = vunpack.c.l.b16 %v233
        %v385 = vunpack.c.l.b16 %v235
        %v386 = vunpack.c.l.b16 %v237
        %v387 = vunpack.c.l.b16 %v239
        %v388 = vunpack.c.l.b16 %v241
        %v389 = vunpack.c.l.b16 %v243
        %v390 = vunpack.c.l.b16 %v245
        %v391 = vunpack.c.l.b16 %v247
        %v392 = vpack.c.b16 %v376, %v264
        %v393 = vpack.c.b16 %v377, %v265
        %v394 = vpack.c.b16 %v378, %v266
        %v395 = vpack.c.b16 %v379, %v267
        %v396 = vpack.c.b16 %v380, %v268
        %v397 = vpack.c.b16 %v381, %v269
        %v398 = vpack.c.b16 %v382, %v270
        %v399 = vpack.c.b16 %v383, %v271
        %v400 = vpack.c.b16 %v384, %v272
        %v401 = vpack.c.b16 %v385, %v273
        %v402 = vpack.c.b16 %v386, %v274
        %v403 = vpack.c.b16 %v387, %v275
        %v404 = vpack.c.b16 %v388, %v276
        %v405 = vpack.c.b16 %v389, %v277
        %v406 = vpack.c.b16 %v390, %v278
        %v407 = vpack.c.b16 %v391, %v279
        %v409 = vshrl.u32 %v392, 16
        %v411 = vrot.slane %v409, 7
        %v412 = vshll.u32 %v392, 16
        %v414 = vor.u32 %v411, %v412
        %v416 = vshrl.u32 %v393, 16
        %v418 = vrot.slane %v416, 7
        %v419 = vshll.u32 %v393, 16
        %v421 = vor.u32 %v418, %v419
        %v423 = vshrl.u32 %v394, 16
        %v425 = vrot.slane %v423, 7
        %v426 = vshll.u32 %v394, 16
        %v428 = vor.u32 %v425, %v426
        %v430 = vshrl.u32 %v395, 16
        %v432 = vrot.slane %v430, 7
        %v433 = vshll.u32 %v395, 16
        %v435 = vor.u32 %v432, %v433
        %v437 = vshrl.u32 %v396, 16
        %v439 = vrot.slane %v437, 7
        %v440 = vshll.u32 %v396, 16
        %v442 = vor.u32 %v439, %v440
        %v444 = vshrl.u32 %v397, 16
        %v446 = vrot.slane %v444, 7
        %v447 = vshll.u32 %v397, 16
        %v449 = vor.u32 %v446, %v447
        %v451 = vshrl.u32 %v398, 16
        %v453 = vrot.slane %v451, 7
        %v454 = vshll.u32 %v398, 16
        %v456 = vor.u32 %v453, %v454
        %v458 = vshrl.u32 %v399, 16
        %v460 = vrot.slane %v458, 7
        %v461 = vshll.u32 %v399, 16
        %v463 = vor.u32 %v460, %v461
        %v465 = vshrl.u32 %v400, 16
        %v467 = vrot.slane %v465, 7
        %v468 = vshll.u32 %v400, 16
        %v470 = vor.u32 %v467, %v468
        %v472 = vshrl.u32 %v401, 16
        %v474 = vrot.slane %v472, 7
        %v475 = vshll.u32 %v401, 16
        %v477 = vor.u32 %v474, %v475
        %v479 = vshrl.u32 %v402, 16
        %v481 = vrot.slane %v479, 7
        %v482 = vshll.u32 %v402, 16
        %v484 = vor.u32 %v481, %v482
        %v486 = vshrl.u32 %v403, 16
        %v488 = vrot.slane %v486, 7
        %v489 = vshll.u32 %v403, 16
        %v491 = vor.u32 %v488, %v489
        %v493 = vshrl.u32 %v404, 16
        %v495 = vrot.slane %v493, 7
        %v496 = vshll.u32 %v404, 16
        %v498 = vor.u32 %v495, %v496
        %v500 = vshrl.u32 %v405, 16
        %v502 = vrot.slane %v500, 7
        %v503 = vshll.u32 %v405, 16
        %v505 = vor.u32 %v502, %v503
        %v507 = vshrl.u32 %v406, 16
        %v509 = vrot.slane %v507, 7
        %v510 = vshll.u32 %v406, 16
        %v512 = vor.u32 %v509, %v510
        %v514 = vshrl.u32 %v407, 16
        %v516 = vrot.slane %v514, 7
        %v517 = vshll.u32 %v407, 16
        %v519 = vor.u32 %v516, %v517
        %v552 = vpack.c.b16 %v376, %v376
        %v553 = vpack.c.b16 %v377, %v377
        %v554 = vpack.c.b16 %v378, %v378
        %v555 = vpack.c.b16 %v379, %v379
        %v556 = vpack.c.b16 %v380, %v380
        %v557 = vpack.c.b16 %v381, %v381
        %v558 = vpack.c.b16 %v382, %v382
        %v559 = vpack.c.b16 %v383, %v383
        %v560 = vpack.c.b16 %v384, %v384
        %v561 = vpack.c.b16 %v385, %v385
        %v562 = vpack.c.b16 %v386, %v386
        %v563 = vpack.c.b16 %v387, %v387
        %v564 = vpack.c.b16 %v388, %v388
        %v565 = vpack.c.b16 %v389, %v389
        %v566 = vpack.c.b16 %v390, %v390
        %v567 = vpack.c.b16 %v391, %v391
        %v569 = vshll.u32 %v552, 16
        %v571 = vrot.slane %v569, 3
        %v573 = vshll.u32 %v553, 16
        %v575 = vrot.slane %v573, 3
        %v577 = vshll.u32 %v554, 16
        %v579 = vrot.slane %v577, 3
        %v581 = vshll.u32 %v555, 16
        %v583 = vrot.slane %v581, 3
        %v585 = vshll.u32 %v556, 16
        %v587 = vrot.slane %v585, 3
        %v589 = vshll.u32 %v557, 16
        %v591 = vrot.slane %v589, 3
        %v593 = vshll.u32 %v558, 16
        %v595 = vrot.slane %v593, 3
        %v597 = vshll.u32 %v559, 16
        %v599 = vrot.slane %v597, 3
        %v601 = vshll.u32 %v560, 16
        %v603 = vrot.slane %v601, 3
        %v605 = vshll.u32 %v561, 16
        %v607 = vrot.slane %v605, 3
        %v609 = vshll.u32 %v562, 16
        %v611 = vrot.slane %v609, 3
        %v613 = vshll.u32 %v563, 16
        %v615 = vrot.slane %v613, 3
        %v617 = vshll.u32 %v564, 16
        %v619 = vrot.slane %v617, 3
        %v621 = vshll.u32 %v565, 16
        %v623 = vrot.slane %v621, 3
        %v625 = vshll.u32 %v566, 16
        %v627 = vrot.slane %v625, 3
        %v629 = vshll.u32 %v567, 16
        %v631 = vrot.slane %v629, 3
        %vm648 = vcmask 1040384
        %vm649 = vsmask.f32 256
        %vm650 = vmand %vm648, %vm649
        %v651 = vsel %vm650, %v297, %v414
        %v652 = vsel %vm650, %v300, %v421
        %v653 = vsel %vm650, %v303, %v428
        %v654 = vsel %vm650, %v306, %v435
        %v655 = vsel %vm650, %v309, %v442
        %v656 = vsel %vm650, %v312, %v449
        %v657 = vsel %vm650, %v315, %v456
        %v658 = vsel %vm650, %v318, %v463
        %v659 = vsel %vm650, %v321, %v470
        %v660 = vsel %vm650, %v324, %v477
        %v661 = vsel %vm650, %v327, %v484
        %v662 = vsel %vm650, %v330, %v491
        %v663 = vsel %vm650, %v333, %v498
        %v664 = vsel %vm650, %v336, %v505
        %v665 = vsel %vm650, %v339, %v512
        %v666 = vsel %vm650, %v342, %v519
        %v667 = vsel %vm650, %v411, %v571
        %v668 = vsel %vm650, %v418, %v575
        %v669 = vsel %vm650, %v425, %v579
        %v670 = vsel %vm650, %v432, %v583
        %v671 = vsel %vm650, %v439, %v587
        %v672 = vsel %vm650, %v446, %v591
        %v673 = vsel %vm650, %v453, %v595
        %v674 = vsel %vm650, %v460, %v599
        %v675 = vsel %vm650, %v467, %v603
        %v676 = vsel %vm650, %v474, %v607
        %v677 = vsel %vm650, %v481, %v611
        %v678 = vsel %vm650, %v488, %v615
        %v679 = vsel %vm650, %v495, %v619
        %v680 = vsel %vm650, %v502, %v623
        %v681 = vsel %vm650, %v509, %v627
        %v682 = vsel %vm650, %v516, %v631
        %vm683 = vsmask.f32 7424
        %v685 = vshrl.u32 %v651, 16
        %v687 = vshll.u32 %v651, 16
        %v689 = vrot.slane %v687, 1
        %v690 = vor.u32 %v685, %v689
        %v692 = vshll.u32 %v667, 16
        %v694 = vrot.slane %v692, 1
        %v695 = vsel %vm683, %v690, %v694
        %v697 = vshrl.u32 %v652, 16
        %v699 = vshll.u32 %v652, 16
        %v701 = vrot.slane %v699, 1
        %v702 = vor.u32 %v697, %v701
        %v704 = vshll.u32 %v668, 16
        %v706 = vrot.slane %v704, 1
        %v707 = vsel %vm683, %v702, %v706
        %v709 = vshrl.u32 %v653, 16
        %v711 = vshll.u32 %v653, 16
        %v713 = vrot.slane %v711, 1
        %v714 = vor.u32 %v709, %v713
        %v716 = vshll.u32 %v669, 16
        %v718 = vrot.slane %v716, 1
        %v719 = vsel %vm683, %v714, %v718
        %v721 = vshrl.u32 %v654, 16
        %v723 = vshll.u32 %v654, 16
        %v725 = vrot.slane %v723, 1
        %v726 = vor.u32 %v721, %v725
        %v728 = vshll.u32 %v670, 16
        %v730 = vrot.slane %v728, 1
        %v731 = vsel %vm683, %v726, %v730
        %v733 = vshrl.u32 %v655, 16
        %v735 = vshll.u32 %v655, 16
        %v737 = vrot.slane %v735, 1
        %v738 = vor.u32 %v733, %v737
        %v740 = vshll.u32 %v671, 16
        %v742 = vrot.slane %v740, 1
        %v743 = vsel %vm683, %v738, %v742
        %v745 = vshrl.u32 %v656, 16
        %v747 = vshll.u32 %v656, 16
        %v749 = vrot.slane %v747, 1
        %v750 = vor.u32 %v745, %v749
        %v752 = vshll.u32 %v672, 16
        %v754 = vrot.slane %v752, 1
        %v755 = vsel %vm683, %v750, %v754
        %v757 = vshrl.u32 %v657, 16
        %v759 = vshll.u32 %v657, 16
        %v761 = vrot.slane %v759, 1
        %v762 = vor.u32 %v757, %v761
        %v764 = vshll.u32 %v673, 16
        %v766 = vrot.slane %v764, 1
        %v767 = vsel %vm683, %v762, %v766
        %v769 = vshrl.u32 %v658, 16
        %v771 = vshll.u32 %v658, 16
        %v773 = vrot.slane %v771, 1
        %v774 = vor.u32 %v769, %v773
        %v776 = vshll.u32 %v674, 16
        %v778 = vrot.slane %v776, 1
        %v779 = vsel %vm683, %v774, %v778
        %v781 = vshrl.u32 %v659, 16
        %v783 = vshll.u32 %v659, 16
        %v785 = vrot.slane %v783, 1
        %v786 = vor.u32 %v781, %v785
        %v788 = vshll.u32 %v675, 16
        %v790 = vrot.slane %v788, 1
        %v791 = vsel %vm683, %v786, %v790
        %v793 = vshrl.u32 %v660, 16
        %v795 = vshll.u32 %v660, 16
        %v797 = vrot.slane %v795, 1
        %v798 = vor.u32 %v793, %v797
        %v800 = vshll.u32 %v676, 16
        %v802 = vrot.slane %v800, 1
        %v803 = vsel %vm683, %v798, %v802
        %v805 = vshrl.u32 %v661, 16
        %v807 = vshll.u32 %v661, 16
        %v809 = vrot.slane %v807, 1
        %v810 = vor.u32 %v805, %v809
        %v812 = vshll.u32 %v677, 16
        %v814 = vrot.slane %v812, 1
        %v815 = vsel %vm683, %v810, %v814
        %v817 = vshrl.u32 %v662, 16
        %v819 = vshll.u32 %v662, 16
        %v821 = vrot.slane %v819, 1
        %v822 = vor.u32 %v817, %v821
        %v824 = vshll.u32 %v678, 16
        %v826 = vrot.slane %v824, 1
        %v827 = vsel %vm683, %v822, %v826
        %v829 = vshrl.u32 %v663, 16
        %v831 = vshll.u32 %v663, 16
        %v833 = vrot.slane %v831, 1
        %v834 = vor.u32 %v829, %v833
        %v836 = vshll.u32 %v679, 16
        %v838 = vrot.slane %v836, 1
        %v839 = vsel %vm683, %v834, %v838
        %v841 = vshrl.u32 %v664, 16
        %v843 = vshll.u32 %v664, 16
        %v845 = vrot.slane %v843, 1
        %v846 = vor.u32 %v841, %v845
        %v848 = vshll.u32 %v680, 16
        %v850 = vrot.slane %v848, 1
        %v851 = vsel %vm683, %v846, %v850
        %v853 = vshrl.u32 %v665, 16
        %v855 = vshll.u32 %v665, 16
        %v857 = vrot.slane %v855, 1
        %v858 = vor.u32 %v853, %v857
        %v860 = vshll.u32 %v681, 16
        %v862 = vrot.slane %v860, 1
        %v863 = vsel %vm683, %v858, %v862
        %vm909 = vcmask 1046528
        %v910 = vrot.slane %v651, 1
        %v911 = vrot.slane %v667, 1
        %v912 = vsel %vm909, %v910, %v911
        %v913 = vrot.slane %v652, 1
        %v914 = vrot.slane %v668, 1
        %v915 = vsel %vm909, %v913, %v914
        %v916 = vrot.slane %v653, 1
        %v917 = vrot.slane %v669, 1
        %v918 = vsel %vm909, %v916, %v917
        %v919 = vrot.slane %v654, 1
        %v920 = vrot.slane %v670, 1
        %v921 = vsel %vm909, %v919, %v920
        %v922 = vrot.slane %v655, 1
        %v923 = vrot.slane %v671, 1
        %v924 = vsel %vm909, %v922, %v923
        %v925 = vrot.slane %v656, 1
        %v926 = vrot.slane %v672, 1
        %v927 = vsel %vm909, %v925, %v926
        %v928 = vrot.slane %v657, 1
        %v929 = vrot.slane %v673, 1
        %v930 = vsel %vm909, %v928, %v929
        %v931 = vrot.slane %v658, 1
        %v932 = vrot.slane %v674, 1
        %v933 = vsel %vm909, %v931, %v932
        %v934 = vrot.slane %v659, 1
        %v935 = vrot.slane %v675, 1
        %v936 = vsel %vm909, %v934, %v935
        %v937 = vrot.slane %v660, 1
        %v938 = vrot.slane %v676, 1
        %v939 = vsel %vm909, %v937, %v938
        %v940 = vrot.slane %v661, 1
        %v941 = vrot.slane %v677, 1
        %v942 = vsel %vm909, %v940, %v941
        %v943 = vrot.slane %v662, 1
        %v944 = vrot.slane %v678, 1
        %v945 = vsel %vm909, %v943, %v944
        %v946 = vrot.slane %v663, 1
        %v947 = vrot.slane %v679, 1
        %v948 = vsel %vm909, %v946, %v947
        %v949 = vrot.slane %v664, 1
        %v950 = vrot.slane %v680, 1
        %v951 = vsel %vm909, %v949, %v950
        %v952 = vrot.slane %v665, 1
        %v953 = vrot.slane %v681, 1
        %v954 = vsel %vm909, %v952, %v953
        %v970 = vld [vmem:[#allocation5] sm:$0xf]
        %v971 = vld [vmem:[#allocation5 + $0x4] sm:$0xf]
        %v972 = vld [vmem:[#allocation5 + $0x8] sm:$0xf]
        %v973 = vld [vmem:[#allocation5 + $0xc] sm:$0xf]
        %v974 = vld [vmem:[#allocation5 + $0x10] sm:$0xf]
        %v975 = vld [vmem:[#allocation5 + $0x14] sm:$0xf]
        %v976 = vld [vmem:[#allocation5 + $0x18] sm:$0xf]
        %v977 = vld [vmem:[#allocation5 + $0x1c] sm:$0xf]
        %v978 = vld [vmem:[#allocation5 + $0x20] sm:$0xf]
        %v979 = vld [vmem:[#allocation5 + $0x24] sm:$0xf]
        %v980 = vld [vmem:[#allocation5 + $0x28] sm:$0xf]
        %v981 = vld [vmem:[#allocation5 + $0x2c] sm:$0xf]
        %v982 = vld [vmem:[#allocation5 + $0x30] sm:$0xf]
        %v983 = vld [vmem:[#allocation5 + $0x34] sm:$0xf]
        %v984 = vld [vmem:[#allocation5 + $0x38] sm:$0xf]
        %v985 = vld [vmem:[#allocation5 + $0x3c] sm:$0xf]
        %v986 = vld [vmem:[#allocation5 + $0x40] sm:$0xf]
        %v987 = vld [vmem:[#allocation5 + $0x44] sm:$0xf]
        %v988 = vld [vmem:[#allocation5 + $0x48] sm:$0xf]
        %v989 = vld [vmem:[#allocation5 + $0x4c] sm:$0xf]
        %v990 = vld [vmem:[#allocation5 + $0x50] sm:$0xf]
        %v991 = vld [vmem:[#allocation5 + $0x54] sm:$0xf]
        %v992 = vld [vmem:[#allocation5 + $0x58] sm:$0xf]
        %v993 = vld [vmem:[#allocation5 + $0x5c] sm:$0xf]
        %v994 = vld [vmem:[#allocation5 + $0x60] sm:$0xf]
        %v995 = vld [vmem:[#allocation5 + $0x64] sm:$0xf]
        %v996 = vld [vmem:[#allocation5 + $0x68] sm:$0xf]
        %v997 = vld [vmem:[#allocation5 + $0x6c] sm:$0xf]
        %v998 = vld [vmem:[#allocation5 + $0x70] sm:$0xf]
        %v999 = vld [vmem:[#allocation5 + $0x74] sm:$0xf]
        %v1000 = vld [vmem:[#allocation5 + $0x78] sm:$0xf]
        %v1001 = vld [vmem:[#allocation5 + $0x7c] sm:$0xf]
        %v1002 = vld [vmem:[#allocation5 + $0x80] sm:$0xf]
        %v1003 = vld [vmem:[#allocation5 + $0x84] sm:$0xf]
        %v1004 = vld [vmem:[#allocation5 + $0x88] sm:$0xf]
        %v1005 = vld [vmem:[#allocation5 + $0x8c] sm:$0xf]
        %v1006 = vld [vmem:[#allocation5 + $0x90] sm:$0xf]
        %v1007 = vld [vmem:[#allocation5 + $0x94] sm:$0xf]
        %v1008 = vld [vmem:[#allocation5 + $0x98] sm:$0xf]
        %v1009 = vld [vmem:[#allocation5 + $0x9c] sm:$0xf]
        %v1010 = vld [vmem:[#allocation5 + $0xa0] sm:$0xf]
        %v1011 = vld [vmem:[#allocation5 + $0xa4] sm:$0xf]
        %v1012 = vld [vmem:[#allocation5 + $0xa8] sm:$0xf]
        %v1013 = vld [vmem:[#allocation5 + $0xac] sm:$0xf]
        %v1014 = vld [vmem:[#allocation5 + $0xb0] sm:$0xf]
        %v1015 = vld [vmem:[#allocation5 + $0xb4] sm:$0xf]
        %v1016 = vld [vmem:[#allocation5 + $0xb8] sm:$0xf]
        %v1017 = vld [vmem:[#allocation5 + $0xbc] sm:$0xf]
        %v1019 = vshrl.u32 %v666, 16
        %v1021 = vshll.u32 %v666, 16
        %v1023 = vrot.slane %v1021, 1
        %v1024 = vor.u32 %v1019, %v1023
        %v1026 = vshll.u32 %v682, 16
        %v1028 = vrot.slane %v1026, 1
        %v1029 = vsel %vm683, %v1024, %v1028
        %v1033 = vrot.slane %v666, 1
        %v1034 = vrot.slane %v682, 1
        %v1035 = vsel %vm909, %v1033, %v1034
        %s1037 = scalar_lea.vmem [#allocation5], 192
        %v1038 = vld [vmem:[%s1037] sm:$0xf]
        %v1039 = vld [vmem:[%s1037 + $0x4] sm:$0xf]
        %v1040 = vld [vmem:[%s1037 + $0x8] sm:$0xf]
        %v1041 = vld [vmem:[%s1037 + $0xc] sm:$0xf]
        %v1042 = vld [vmem:[%s1037 + $0x10] sm:$0xf]
        %v1043 = vld [vmem:[%s1037 + $0x14] sm:$0xf]
        %v1044 = vld [vmem:[%s1037 + $0x18] sm:$0xf]
        %v1045 = vld [vmem:[%s1037 + $0x1c] sm:$0xf]
        %v1046 = vld [vmem:[%s1037 + $0x20] sm:$0xf]
        %v1047 = vld [vmem:[%s1037 + $0x24] sm:$0xf]
        %v1048 = vld [vmem:[%s1037 + $0x28] sm:$0xf]
        %v1049 = vld [vmem:[%s1037 + $0x2c] sm:$0xf]
        %v1050 = vld [vmem:[%s1037 + $0x30] sm:$0xf]
        %v1051 = vld [vmem:[%s1037 + $0x34] sm:$0xf]
        %v1052 = vld [vmem:[%s1037 + $0x38] sm:$0xf]
        %v1053 = vld [vmem:[%s1037 + $0x3c] sm:$0xf]
        %v1054 = vld [vmem:[%s1037 + $0x40] sm:$0xf]
        %v1055 = vld [vmem:[%s1037 + $0x44] sm:$0xf]
        %v1056 = vld [vmem:[%s1037 + $0x48] sm:$0xf]
        %v1057 = vld [vmem:[%s1037 + $0x4c] sm:$0xf]
        %v1058 = vld [vmem:[%s1037 + $0x50] sm:$0xf]
        %v1059 = vld [vmem:[%s1037 + $0x54] sm:$0xf]
        %v1060 = vld [vmem:[%s1037 + $0x58] sm:$0xf]
        %v1061 = vld [vmem:[%s1037 + $0x5c] sm:$0xf]
        %v1062 = vld [vmem:[%s1037 + $0x60] sm:$0xf]
        %v1063 = vld [vmem:[%s1037 + $0x64] sm:$0xf]
        %v1064 = vld [vmem:[%s1037 + $0x68] sm:$0xf]
        %v1065 = vld [vmem:[%s1037 + $0x6c] sm:$0xf]
        %v1066 = vld [vmem:[%s1037 + $0x70] sm:$0xf]
        %v1067 = vld [vmem:[%s1037 + $0x74] sm:$0xf]
        %v1068 = vld [vmem:[%s1037 + $0x78] sm:$0xf]
        %v1069 = vld [vmem:[%s1037 + $0x7c] sm:$0xf]
        %v1070 = vld [vmem:[%s1037 + $0x80] sm:$0xf]
        %v1071 = vld [vmem:[%s1037 + $0x84] sm:$0xf]
        %v1072 = vld [vmem:[%s1037 + $0x88] sm:$0xf]
        %v1073 = vld [vmem:[%s1037 + $0x8c] sm:$0xf]
        %v1074 = vld [vmem:[%s1037 + $0x90] sm:$0xf]
        %v1075 = vld [vmem:[%s1037 + $0x94] sm:$0xf]
        %v1076 = vld [vmem:[%s1037 + $0x98] sm:$0xf]
        %v1077 = vld [vmem:[%s1037 + $0x9c] sm:$0xf]
        %v1078 = vld [vmem:[%s1037 + $0xa0] sm:$0xf]
        %v1079 = vld [vmem:[%s1037 + $0xa4] sm:$0xf]
        %v1080 = vld [vmem:[%s1037 + $0xa8] sm:$0xf]
        %v1081 = vld [vmem:[%s1037 + $0xac] sm:$0xf]
        %v1082 = vld [vmem:[%s1037 + $0xb0] sm:$0xf]
        %v1083 = vld [vmem:[%s1037 + $0xb4] sm:$0xf]
        %v1084 = vld [vmem:[%s1037 + $0xb8] sm:$0xf]
        %v1085 = vld [vmem:[%s1037 + $0xbc] sm:$0xf]
        %v1134 = vunpack.c.l.b16 %v1038
        %v1135 = vunpack.c.l.b16 %v1039
        %v1136 = vunpack.c.l.b16 %v1040
        %v1137 = vunpack.c.l.b16 %v1041
        %v1138 = vunpack.c.l.b16 %v1042
        %v1139 = vunpack.c.l.b16 %v1043
        %v1140 = vunpack.c.l.b16 %v1044
        %v1141 = vunpack.c.l.b16 %v1045
        %v1142 = vunpack.c.l.b16 %v1046
        %v1143 = vunpack.c.l.b16 %v1047
        %v1144 = vunpack.c.l.b16 %v1048
        %v1145 = vunpack.c.l.b16 %v1049
        %v1146 = vunpack.c.l.b16 %v1050
        %v1147 = vunpack.c.l.b16 %v1051
        %v1148 = vunpack.c.l.b16 %v1052
        %v1149 = vunpack.c.l.b16 %v1053
        %v1150 = vunpack.c.l.b16 %v1054
        %v1151 = vunpack.c.l.b16 %v1055
        %v1152 = vunpack.c.l.b16 %v1056
        %v1153 = vunpack.c.l.b16 %v1057
        %v1154 = vunpack.c.l.b16 %v1058
        %v1155 = vunpack.c.l.b16 %v1059
        %v1156 = vunpack.c.l.b16 %v1060
        %v1157 = vunpack.c.l.b16 %v1061
        %v1158 = vunpack.c.l.b16 %v1062
        %v1159 = vunpack.c.l.b16 %v1063
        %v1160 = vunpack.c.l.b16 %v1064
        %v1161 = vunpack.c.l.b16 %v1065
        %v1162 = vunpack.c.l.b16 %v1066
        %v1163 = vunpack.c.l.b16 %v1067
        %v1164 = vunpack.c.l.b16 %v1068
        %v1165 = vunpack.c.l.b16 %v1069
        %v1166 = vunpack.c.l.b16 %v1070
        %v1167 = vunpack.c.l.b16 %v1071
        %v1168 = vunpack.c.l.b16 %v1072
        %v1169 = vunpack.c.l.b16 %v1073
        %v1170 = vunpack.c.l.b16 %v1074
        %v1171 = vunpack.c.l.b16 %v1075
        %v1172 = vunpack.c.l.b16 %v1076
        %v1173 = vunpack.c.l.b16 %v1077
        %v1174 = vunpack.c.l.b16 %v1078
        %v1175 = vunpack.c.l.b16 %v1079
        %v1176 = vunpack.c.l.b16 %v1080
        %v1177 = vunpack.c.l.b16 %v1081
        %v1178 = vunpack.c.l.b16 %v1082
        %v1179 = vunpack.c.l.b16 %v1083
        %v1180 = vunpack.c.l.b16 %v1084
        %v1181 = vunpack.c.l.b16 %v1085
        %v1182 = vpack.c.b16 %v1135, %v1134
        %v1183 = vpack.c.b16 %v1137, %v1136
        %v1184 = vpack.c.b16 %v1139, %v1138
        %v1185 = vpack.c.b16 %v1141, %v1140
        %v1186 = vpack.c.b16 %v1143, %v1142
        %v1187 = vpack.c.b16 %v1145, %v1144
        %v1188 = vpack.c.b16 %v1147, %v1146
        %v1189 = vpack.c.b16 %v1149, %v1148
        %v1190 = vpack.c.b16 %v1151, %v1150
        %v1191 = vpack.c.b16 %v1153, %v1152
        %v1192 = vpack.c.b16 %v1155, %v1154
        %v1193 = vpack.c.b16 %v1157, %v1156
        %v1194 = vpack.c.b16 %v1159, %v1158
        %v1195 = vpack.c.b16 %v1161, %v1160
        %v1196 = vpack.c.b16 %v1163, %v1162
        %v1197 = vpack.c.b16 %v1165, %v1164
        %v1198 = vpack.c.b16 %v1167, %v1166
        %v1199 = vpack.c.b16 %v1169, %v1168
        %v1200 = vpack.c.b16 %v1171, %v1170
        %v1201 = vpack.c.b16 %v1173, %v1172
        %v1202 = vpack.c.b16 %v1175, %v1174
        %v1203 = vpack.c.b16 %v1177, %v1176
        %v1204 = vpack.c.b16 %v1179, %v1178
        %v1205 = vpack.c.b16 %v1181, %v1180
        %1230 = vmatprep.subr.bf16.mxu0 0
        %1231 = vmatpush1.bf16.msra.mxu0 %v1189
        %1232 = vmatprep.subr.bf16.mxu0 0
        %1233 = vmatpush1.bf16.msra.mxu0 %v1188
        %1234 = vmatprep.subr.bf16.mxu0 0
        %1235 = vmatpush1.bf16.msra.mxu0 %v1187
        %1236 = vmatprep.subr.bf16.mxu0 0
        %1237 = vmatpush1.bf16.msra.mxu0 %v1186
        %1238 = vmatprep.subr.bf16.mxu0 0
        %1239 = vmatpush1.bf16.msra.mxu0 %v1185
        %1240 = vmatprep.subr.bf16.mxu0 0
        %1241 = vmatpush1.bf16.msra.mxu0 %v1184
        %1242 = vmatprep.subr.bf16.mxu0 0
        %1243 = vmatpush1.bf16.msra.mxu0 %v1183
        %1244 = vmatprep.subr.bf16.mxu0 0
        %1245 = vmatpush1.bf16.msra.mxu0 %v1182
        %1246 = vmatprep.subr.bf16.mxu0 0
        %1247 = vmatpush2.bf16.msra.mxu0 %v1197
        %1248 = vmatprep.subr.bf16.mxu0 0
        %1249 = vmatpush2.bf16.msra.mxu0 %v1196
        %1250 = vmatprep.subr.bf16.mxu0 0
        %1251 = vmatpush2.bf16.msra.mxu0 %v1195
        %1252 = vmatprep.subr.bf16.mxu0 0
        %1253 = vmatpush2.bf16.msra.mxu0 %v1194
        %1254 = vmatprep.subr.bf16.mxu0 0
        %1255 = vmatpush2.bf16.msra.mxu0 %v1193
        %1256 = vmatprep.subr.bf16.mxu0 0
        %1257 = vmatpush2.bf16.msra.mxu0 %v1192
        %1258 = vmatprep.subr.bf16.mxu0 0
        %1259 = vmatpush2.bf16.msra.mxu0 %v1191
        %1260 = vmatprep.subr.bf16.mxu0 0
        %1261 = vmatpush2.bf16.msra.mxu0 %v1190
        %1262 = vmatprep.mubr.bf16.mxu0 %v707
        %1263 = vmatmul.mubr.bf16.gmra.mxu0 %v652
        %v1264 = vpop.f32.mrf.mxu0
        %v1265 = vadd.f32 0.0, %v1264
        %v1266 = vpop.f32.mrf.mxu0
        %v1267 = vpop.f32.mrf.mxu0
        %v1268 = vadd.f32 0.0, %v1267
        %v1269 = vpop.f32.mrf.mxu0
        %1270 = vmatprep.mubr.bf16.mxu0 %v695
        %1271 = vmatmul.mubr.bf16.gmra.mxu0 %v651
        %v1272 = vpop.f32.mrf.mxu0
        %v1273 = vadd.f32 0.0, %v1272
        %v1274 = vpop.f32.mrf.mxu0
        %v1275 = vpop.f32.mrf.mxu0
        %v1276 = vadd.f32 0.0, %v1275
        %v1277 = vpop.f32.mrf.mxu0
        %1278 = vmatprep.mubr.bf16.mxu0 %v719
        %1279 = vmatmul.mubr.bf16.gmra.mxu0 %v653
        %v1280 = vpop.f32.mrf.mxu0
        %v1281 = vadd.f32 0.0, %v1280
        %v1282 = vpop.f32.mrf.mxu0
        %v1283 = vpop.f32.mrf.mxu0
        %v1284 = vadd.f32 0.0, %v1283
        %v1285 = vpop.f32.mrf.mxu0
        %1286 = vmatprep.mubr.bf16.mxu0 %v731
        %1287 = vmatmul.mubr.bf16.gmra.mxu0 %v654
        %v1288 = vpop.f32.mrf.mxu0
        %v1289 = vadd.f32 0.0, %v1288
        %v1290 = vpop.f32.mrf.mxu0
        %v1291 = vpop.f32.mrf.mxu0
        %v1292 = vadd.f32 0.0, %v1291
        %v1293 = vpop.f32.mrf.mxu0
        %1294 = vmatprep.mubr.bf16.mxu0 %v743
        %1295 = vmatmul.mubr.bf16.gmra.mxu0 %v655
        %v1296 = vpop.f32.mrf.mxu0
        %v1297 = vadd.f32 0.0, %v1296
        %v1298 = vpop.f32.mrf.mxu0
        %v1299 = vpop.f32.mrf.mxu0
        %v1300 = vadd.f32 0.0, %v1299
        %v1301 = vpop.f32.mrf.mxu0
        %1302 = vmatprep.mubr.bf16.mxu0 %v755
        %1303 = vmatmul.mubr.bf16.gmra.mxu0 %v656
        %v1304 = vpop.f32.mrf.mxu0
        %v1305 = vadd.f32 0.0, %v1304
        %v1306 = vpop.f32.mrf.mxu0
        %v1307 = vpop.f32.mrf.mxu0
        %v1308 = vadd.f32 0.0, %v1307
        %v1309 = vpop.f32.mrf.mxu0
        %1310 = vmatprep.mubr.bf16.mxu0 %v767
        %1311 = vmatmul.mubr.bf16.gmra.mxu0 %v657
        %v1312 = vpop.f32.mrf.mxu0
        %v1313 = vadd.f32 0.0, %v1312
        %v1314 = vpop.f32.mrf.mxu0
        %v1315 = vpop.f32.mrf.mxu0
        %v1316 = vadd.f32 0.0, %v1315
        %v1317 = vpop.f32.mrf.mxu0
        %1318 = vmatprep.mubr.bf16.mxu0 %v779
        %1319 = vmatmul.mubr.bf16.gmra.mxu0 %v658
        %v1320 = vpop.f32.mrf.mxu0
        %v1321 = vadd.f32 0.0, %v1320
        %v1322 = vpop.f32.mrf.mxu0
        %v1323 = vpop.f32.mrf.mxu0
        %v1324 = vadd.f32 0.0, %v1323
        %v1325 = vpop.f32.mrf.mxu0
        %1326 = vmatprep.mubr.bf16.mxu0 %v791
        %1327 = vmatmul.mubr.bf16.gmra.mxu0 %v659
        %v1328 = vpop.f32.mrf.mxu0
        %v1329 = vadd.f32 0.0, %v1328
        %v1330 = vpop.f32.mrf.mxu0
        %v1331 = vpop.f32.mrf.mxu0
        %v1332 = vadd.f32 0.0, %v1331
        %v1333 = vpop.f32.mrf.mxu0
        %1334 = vmatprep.mubr.bf16.mxu0 %v803
        %1335 = vmatmul.mubr.bf16.gmra.mxu0 %v660
        %v1336 = vpop.f32.mrf.mxu0
        %v1337 = vadd.f32 0.0, %v1336
        %v1338 = vpop.f32.mrf.mxu0
        %v1339 = vpop.f32.mrf.mxu0
        %v1340 = vadd.f32 0.0, %v1339
        %v1341 = vpop.f32.mrf.mxu0
        %1342 = vmatprep.mubr.bf16.mxu0 %v815
        %1343 = vmatmul.mubr.bf16.gmra.mxu0 %v661
        %v1344 = vpop.f32.mrf.mxu0
        %v1345 = vadd.f32 0.0, %v1344
        %v1346 = vpop.f32.mrf.mxu0
        %v1347 = vpop.f32.mrf.mxu0
        %v1348 = vadd.f32 0.0, %v1347
        %v1349 = vpop.f32.mrf.mxu0
        %1350 = vmatprep.mubr.bf16.mxu0 %v827
        %1351 = vmatmul.mubr.bf16.gmra.mxu0 %v662
        %v1352 = vpop.f32.mrf.mxu0
        %v1353 = vadd.f32 0.0, %v1352
        %v1354 = vpop.f32.mrf.mxu0
        %v1355 = vpop.f32.mrf.mxu0
        %v1356 = vadd.f32 0.0, %v1355
        %v1357 = vpop.f32.mrf.mxu0
        %1358 = vmatprep.mubr.bf16.mxu0 %v839
        %1359 = vmatmul.mubr.bf16.gmra.mxu0 %v663
        %v1360 = vpop.f32.mrf.mxu0
        %v1361 = vadd.f32 0.0, %v1360
        %v1362 = vpop.f32.mrf.mxu0
        %v1363 = vpop.f32.mrf.mxu0
        %v1364 = vadd.f32 0.0, %v1363
        %v1365 = vpop.f32.mrf.mxu0
        %1366 = vmatprep.mubr.bf16.mxu0 %v851
        %1367 = vmatmul.mubr.bf16.gmra.mxu0 %v664
        %v1368 = vpop.f32.mrf.mxu0
        %v1369 = vadd.f32 0.0, %v1368
        %v1370 = vpop.f32.mrf.mxu0
        %v1371 = vpop.f32.mrf.mxu0
        %v1372 = vadd.f32 0.0, %v1371
        %v1373 = vpop.f32.mrf.mxu0
        %1374 = vmatprep.mubr.bf16.mxu0 %v863
        %1375 = vmatmul.mubr.bf16.gmra.mxu0 %v665
        %v1376 = vpop.f32.mrf.mxu0
        %v1377 = vadd.f32 0.0, %v1376
        %v1378 = vpop.f32.mrf.mxu0
        %v1379 = vpop.f32.mrf.mxu0
        %v1380 = vadd.f32 0.0, %v1379
        %v1381 = vpop.f32.mrf.mxu0
        %1382 = vmatprep.mubr.bf16.mxu0 %v1029
        %1383 = vmatmul.mubr.bf16.gmra.mxu0 %v666
        %v1384 = vpop.f32.mrf.mxu0
        %v1385 = vadd.f32 0.0, %v1384
        %v1386 = vpop.f32.mrf.mxu0
        %v1387 = vpop.f32.mrf.mxu0
        %v1388 = vadd.f32 0.0, %v1387
        %v1389 = vpop.f32.mrf.mxu0
        %1390 = vdwg.mxu0
        %1391 = vmatprep.subr.bf16.mxu0 0
        %1392 = vmatpush1.bf16.msra.mxu0 %v1205
        %1393 = vmatprep.subr.bf16.mxu0 0
        %1394 = vmatpush1.bf16.msra.mxu0 %v1204
        %1395 = vmatprep.subr.bf16.mxu0 0
        %1396 = vmatpush1.bf16.msra.mxu0 %v1203
        %1397 = vmatprep.subr.bf16.mxu0 0
        %1398 = vmatpush1.bf16.msra.mxu0 %v1202
        %1399 = vmatprep.subr.bf16.mxu0 0
        %1400 = vmatpush1.bf16.msra.mxu0 %v1201
        %1401 = vmatprep.subr.bf16.mxu0 0
        %1402 = vmatpush1.bf16.msra.mxu0 %v1200
        %1403 = vmatprep.subr.bf16.mxu0 0
        %1404 = vmatpush1.bf16.msra.mxu0 %v1199
        %1405 = vmatprep.subr.bf16.mxu0 0
        %1406 = vmatpush1.bf16.msra.mxu0 %v1198
        %1407 = vmatprep.subr.bf16.mxu0 0
        %1408 = vmatpush2.bf16.msra.mxu0 0
        %1409 = vmatprep.subr.bf16.mxu0 0
        %1410 = vmatpush2.bf16.msra.mxu0 0
        %1411 = vmatprep.subr.bf16.mxu0 0
        %1412 = vmatpush2.bf16.msra.mxu0 0
        %1413 = vmatprep.subr.bf16.mxu0 0
        %1414 = vmatpush2.bf16.msra.mxu0 0
        %1415 = vmatprep.subr.bf16.mxu0 0
        %1416 = vmatpush2.bf16.msra.mxu0 0
        %1417 = vmatprep.subr.bf16.mxu0 0
        %1418 = vmatpush2.bf16.msra.mxu0 0
        %1419 = vmatprep.subr.bf16.mxu0 0
        %1420 = vmatpush2.bf16.msra.mxu0 0
        %1421 = vmatprep.subr.bf16.mxu0 0
        %1422 = vmatpush2.bf16.msra.mxu0 0
        %1423 = vmatprep.mubr.bf16.mxu0 0
        %1424 = vmatmul.mubr.bf16.gmra.mxu0 %v915
        %v1425 = vpop.f32.mrf.mxu0
        %v1426 = vadd.f32 %v1265, %v1425
        %v1427 = vpop.f32.mrf.mxu0
        %v1428 = vpop.f32.mrf.mxu0
        %v1429 = vadd.f32 %v1268, %v1428
        %v1430 = vpop.f32.mrf.mxu0
        %1431 = vmatprep.mubr.bf16.mxu0 0
        %1432 = vmatmul.mubr.bf16.gmra.mxu0 %v912
        %v1433 = vpop.f32.mrf.mxu0
        %v1434 = vadd.f32 %v1273, %v1433
        %v1435 = vpop.f32.mrf.mxu0
        %v1436 = vpop.f32.mrf.mxu0
        %v1437 = vadd.f32 %v1276, %v1436
        %v1438 = vpop.f32.mrf.mxu0
        %1439 = vmatprep.mubr.bf16.mxu0 0
        %1440 = vmatmul.mubr.bf16.gmra.mxu0 %v918
        %v1441 = vpop.f32.mrf.mxu0
        %v1442 = vadd.f32 %v1281, %v1441
        %v1443 = vpop.f32.mrf.mxu0
        %v1444 = vpop.f32.mrf.mxu0
        %v1445 = vadd.f32 %v1284, %v1444
        %v1446 = vpop.f32.mrf.mxu0
        %1447 = vmatprep.mubr.bf16.mxu0 0
        %1448 = vmatmul.mubr.bf16.gmra.mxu0 %v921
        %v1449 = vpop.f32.mrf.mxu0
        %v1450 = vadd.f32 %v1289, %v1449
        %v1451 = vpop.f32.mrf.mxu0
        %v1452 = vpop.f32.mrf.mxu0
        %v1453 = vadd.f32 %v1292, %v1452
        %v1454 = vpop.f32.mrf.mxu0
        %1455 = vmatprep.mubr.bf16.mxu0 0
        %1456 = vmatmul.mubr.bf16.gmra.mxu0 %v924
        %v1457 = vpop.f32.mrf.mxu0
        %v1458 = vadd.f32 %v1297, %v1457
        %v1459 = vpop.f32.mrf.mxu0
        %v1460 = vpop.f32.mrf.mxu0
        %v1461 = vadd.f32 %v1300, %v1460
        %v1462 = vpop.f32.mrf.mxu0
        %1463 = vmatprep.mubr.bf16.mxu0 0
        %1464 = vmatmul.mubr.bf16.gmra.mxu0 %v927
        %v1465 = vpop.f32.mrf.mxu0
        %v1466 = vadd.f32 %v1305, %v1465
        %v1467 = vpop.f32.mrf.mxu0
        %v1468 = vpop.f32.mrf.mxu0
        %v1469 = vadd.f32 %v1308, %v1468
        %v1470 = vpop.f32.mrf.mxu0
        %1471 = vmatprep.mubr.bf16.mxu0 0
        %1472 = vmatmul.mubr.bf16.gmra.mxu0 %v930
        %v1473 = vpop.f32.mrf.mxu0
        %v1474 = vadd.f32 %v1313, %v1473
        %v1475 = vpop.f32.mrf.mxu0
        %v1476 = vpop.f32.mrf.mxu0
        %v1477 = vadd.f32 %v1316, %v1476
        %v1478 = vpop.f32.mrf.mxu0
        %1479 = vmatprep.mubr.bf16.mxu0 0
        %1480 = vmatmul.mubr.bf16.gmra.mxu0 %v933
        %v1481 = vpop.f32.mrf.mxu0
        %v1482 = vadd.f32 %v1321, %v1481
        %v1483 = vpop.f32.mrf.mxu0
        %v1484 = vpop.f32.mrf.mxu0
        %v1485 = vadd.f32 %v1324, %v1484
        %v1486 = vpop.f32.mrf.mxu0
        %1487 = vmatprep.mubr.bf16.mxu0 0
        %1488 = vmatmul.mubr.bf16.gmra.mxu0 %v936
        %v1489 = vpop.f32.mrf.mxu0
        %v1490 = vadd.f32 %v1329, %v1489
        %v1491 = vpop.f32.mrf.mxu0
        %v1492 = vpop.f32.mrf.mxu0
        %v1493 = vadd.f32 %v1332, %v1492
        %v1494 = vpop.f32.mrf.mxu0
        %1495 = vmatprep.mubr.bf16.mxu0 0
        %1496 = vmatmul.mubr.bf16.gmra.mxu0 %v939
        %v1497 = vpop.f32.mrf.mxu0
        %v1498 = vadd.f32 %v1337, %v1497
        %v1499 = vpop.f32.mrf.mxu0
        %v1500 = vpop.f32.mrf.mxu0
        %v1501 = vadd.f32 %v1340, %v1500
        %v1502 = vpop.f32.mrf.mxu0
        %1503 = vmatprep.mubr.bf16.mxu0 0
        %1504 = vmatmul.mubr.bf16.gmra.mxu0 %v942
        %v1505 = vpop.f32.mrf.mxu0
        %v1506 = vadd.f32 %v1345, %v1505
        %v1507 = vpop.f32.mrf.mxu0
        %v1508 = vpop.f32.mrf.mxu0
        %v1509 = vadd.f32 %v1348, %v1508
        %v1510 = vpop.f32.mrf.mxu0
        %1511 = vmatprep.mubr.bf16.mxu0 0
        %1512 = vmatmul.mubr.bf16.gmra.mxu0 %v945
        %v1513 = vpop.f32.mrf.mxu0
        %v1514 = vadd.f32 %v1353, %v1513
        %v1515 = vpop.f32.mrf.mxu0
        %v1516 = vpop.f32.mrf.mxu0
        %v1517 = vadd.f32 %v1356, %v1516
        %v1518 = vpop.f32.mrf.mxu0
        %1519 = vmatprep.mubr.bf16.mxu0 0
        %1520 = vmatmul.mubr.bf16.gmra.mxu0 %v948
        %v1521 = vpop.f32.mrf.mxu0
        %v1522 = vadd.f32 %v1361, %v1521
        %v1523 = vpop.f32.mrf.mxu0
        %v1524 = vpop.f32.mrf.mxu0
        %v1525 = vadd.f32 %v1364, %v1524
        %v1526 = vpop.f32.mrf.mxu0
        %1527 = vmatprep.mubr.bf16.mxu0 0
        %1528 = vmatmul.mubr.bf16.gmra.mxu0 %v951
        %v1529 = vpop.f32.mrf.mxu0
        %v1530 = vadd.f32 %v1369, %v1529
        %v1531 = vpop.f32.mrf.mxu0
        %v1532 = vpop.f32.mrf.mxu0
        %v1533 = vadd.f32 %v1372, %v1532
        %v1534 = vpop.f32.mrf.mxu0
        %1535 = vmatprep.mubr.bf16.mxu0 0
        %1536 = vmatmul.mubr.bf16.gmra.mxu0 %v954
        %v1537 = vpop.f32.mrf.mxu0
        %v1538 = vadd.f32 %v1377, %v1537
        %v1539 = vpop.f32.mrf.mxu0
        %v1540 = vpop.f32.mrf.mxu0
        %v1541 = vadd.f32 %v1380, %v1540
        %v1542 = vpop.f32.mrf.mxu0
        %1543 = vmatprep.mubr.bf16.mxu0 0
        %1544 = vmatmul.mubr.bf16.gmra.mxu0 %v1035
        %v1545 = vpop.f32.mrf.mxu0
        %v1546 = vadd.f32 %v1385, %v1545
        %v1547 = vpop.f32.mrf.mxu0
        %v1548 = vpop.f32.mrf.mxu0
        %v1549 = vadd.f32 %v1388, %v1548
        %v1550 = vpop.f32.mrf.mxu0
        %1551 = vdwg.mxu0
        %v1600 = vunpack.c.l.b16 %v970
        %v1601 = vunpack.c.l.b16 %v971
        %v1602 = vunpack.c.l.b16 %v972
        %v1603 = vunpack.c.l.b16 %v973
        %v1604 = vunpack.c.l.b16 %v974
        %v1605 = vunpack.c.l.b16 %v975
        %v1606 = vunpack.c.l.b16 %v976
        %v1607 = vunpack.c.l.b16 %v977
        %v1608 = vunpack.c.l.b16 %v978
        %v1609 = vunpack.c.l.b16 %v979
        %v1610 = vunpack.c.l.b16 %v980
        %v1611 = vunpack.c.l.b16 %v981
        %v1612 = vunpack.c.l.b16 %v982
        %v1613 = vunpack.c.l.b16 %v983
        %v1614 = vunpack.c.l.b16 %v984
        %v1615 = vunpack.c.l.b16 %v985
        %v1616 = vunpack.c.l.b16 %v986
        %v1617 = vunpack.c.l.b16 %v987
        %v1618 = vunpack.c.l.b16 %v988
        %v1619 = vunpack.c.l.b16 %v989
        %v1620 = vunpack.c.l.b16 %v990
        %v1621 = vunpack.c.l.b16 %v991
        %v1622 = vunpack.c.l.b16 %v992
        %v1623 = vunpack.c.l.b16 %v993
        %v1624 = vunpack.c.l.b16 %v994
        %v1625 = vunpack.c.l.b16 %v995
        %v1626 = vunpack.c.l.b16 %v996
        %v1627 = vunpack.c.l.b16 %v997
        %v1628 = vunpack.c.l.b16 %v998
        %v1629 = vunpack.c.l.b16 %v999
        %v1630 = vunpack.c.l.b16 %v1000
        %v1631 = vunpack.c.l.b16 %v1001
        %v1632 = vunpack.c.l.b16 %v1002
        %v1633 = vunpack.c.l.b16 %v1003
        %v1634 = vunpack.c.l.b16 %v1004
        %v1635 = vunpack.c.l.b16 %v1005
        %v1636 = vunpack.c.l.b16 %v1006
        %v1637 = vunpack.c.l.b16 %v1007
        %v1638 = vunpack.c.l.b16 %v1008
        %v1639 = vunpack.c.l.b16 %v1009
        %v1640 = vunpack.c.l.b16 %v1010
        %v1641 = vunpack.c.l.b16 %v1011
        %v1642 = vunpack.c.l.b16 %v1012
        %v1643 = vunpack.c.l.b16 %v1013
        %v1644 = vunpack.c.l.b16 %v1014
        %v1645 = vunpack.c.l.b16 %v1015
        %v1646 = vunpack.c.l.b16 %v1016
        %v1647 = vunpack.c.l.b16 %v1017
        %v1648 = vpack.c.b16 %v1601, %v1600
        %v1649 = vpack.c.b16 %v1603, %v1602
        %v1650 = vpack.c.b16 %v1605, %v1604
        %v1651 = vpack.c.b16 %v1607, %v1606
        %v1652 = vpack.c.b16 %v1609, %v1608
        %v1653 = vpack.c.b16 %v1611, %v1610
        %v1654 = vpack.c.b16 %v1613, %v1612
        %v1655 = vpack.c.b16 %v1615, %v1614
        %v1656 = vpack.c.b16 %v1617, %v1616
        %v1657 = vpack.c.b16 %v1619, %v1618
        %v1658 = vpack.c.b16 %v1621, %v1620
        %v1659 = vpack.c.b16 %v1623, %v1622
        %v1660 = vpack.c.b16 %v1625, %v1624
        %v1661 = vpack.c.b16 %v1627, %v1626
        %v1662 = vpack.c.b16 %v1629, %v1628
        %v1663 = vpack.c.b16 %v1631, %v1630
        %v1664 = vpack.c.b16 %v1633, %v1632
        %v1665 = vpack.c.b16 %v1635, %v1634
        %v1666 = vpack.c.b16 %v1637, %v1636
        %v1667 = vpack.c.b16 %v1639, %v1638
        %v1668 = vpack.c.b16 %v1641, %v1640
        %v1669 = vpack.c.b16 %v1643, %v1642
        %v1670 = vpack.c.b16 %v1645, %v1644
        %v1671 = vpack.c.b16 %v1647, %v1646
        %1696 = vmatprep.subr.bf16.mxu0 0
        %1697 = vmatpush1.bf16.msra.mxu0 %v1655
        %1698 = vmatprep.subr.bf16.mxu0 0
        %1699 = vmatpush1.bf16.msra.mxu0 %v1654
        %1700 = vmatprep.subr.bf16.mxu0 0
        %1701 = vmatpush1.bf16.msra.mxu0 %v1653
        %1702 = vmatprep.subr.bf16.mxu0 0
        %1703 = vmatpush1.bf16.msra.mxu0 %v1652
        %1704 = vmatprep.subr.bf16.mxu0 0
        %1705 = vmatpush1.bf16.msra.mxu0 %v1651
        %1706 = vmatprep.subr.bf16.mxu0 0
        %1707 = vmatpush1.bf16.msra.mxu0 %v1650
        %1708 = vmatprep.subr.bf16.mxu0 0
        %1709 = vmatpush1.bf16.msra.mxu0 %v1649
        %1710 = vmatprep.subr.bf16.mxu0 0
        %1711 = vmatpush1.bf16.msra.mxu0 %v1648
        %1712 = vmatprep.subr.bf16.mxu0 0
        %1713 = vmatpush2.bf16.msra.mxu0 %v1663
        %1714 = vmatprep.subr.bf16.mxu0 0
        %1715 = vmatpush2.bf16.msra.mxu0 %v1662
        %1716 = vmatprep.subr.bf16.mxu0 0
        %1717 = vmatpush2.bf16.msra.mxu0 %v1661
        %1718 = vmatprep.subr.bf16.mxu0 0
        %1719 = vmatpush2.bf16.msra.mxu0 %v1660
        %1720 = vmatprep.subr.bf16.mxu0 0
        %1721 = vmatpush2.bf16.msra.mxu0 %v1659
        %1722 = vmatprep.subr.bf16.mxu0 0
        %1723 = vmatpush2.bf16.msra.mxu0 %v1658
        %1724 = vmatprep.subr.bf16.mxu0 0
        %1725 = vmatpush2.bf16.msra.mxu0 %v1657
        %1726 = vmatprep.subr.bf16.mxu0 0
        %1727 = vmatpush2.bf16.msra.mxu0 %v1656
        %1728 = vmatprep.mubr.bf16.mxu0 %v695
        %1729 = vmatmul.mubr.bf16.gmra.mxu0 %v651
        %v1730 = vpop.f32.mrf.mxu0
        %v1731 = vadd.f32 %v1426, %v1730
        %v1732 = vpop.f32.mrf.mxu0
        %v1733 = vpop.f32.mrf.mxu0
        %v1734 = vadd.f32 %v1429, %v1733
        %v1735 = vpop.f32.mrf.mxu0
        %1736 = vmatprep.mubr.bf16.mxu0 %v707
        %1737 = vmatmul.mubr.bf16.gmra.mxu0 %v652
        %v1738 = vpop.f32.mrf.mxu0
        %v1739 = vadd.f32 %v1434, %v1738
        %v1740 = vpop.f32.mrf.mxu0
        %v1741 = vpop.f32.mrf.mxu0
        %v1742 = vadd.f32 %v1437, %v1741
        %v1743 = vpop.f32.mrf.mxu0
        %1744 = vmatprep.mubr.bf16.mxu0 %v695
        %1745 = vmatmul.mubr.bf16.gmra.mxu0 %v651
        %v1746 = vpop.f32.mrf.mxu0
        %v1747 = vadd.f32 %v1442, %v1746
        %v1748 = vpop.f32.mrf.mxu0
        %v1749 = vpop.f32.mrf.mxu0
        %v1750 = vadd.f32 %v1445, %v1749
        %v1751 = vpop.f32.mrf.mxu0
        %1752 = vmatprep.mubr.bf16.mxu0 %v719
        %1753 = vmatmul.mubr.bf16.gmra.mxu0 %v653
        %v1754 = vpop.f32.mrf.mxu0
        %v1755 = vadd.f32 %v1450, %v1754
        %v1756 = vpop.f32.mrf.mxu0
        %v1757 = vpop.f32.mrf.mxu0
        %v1758 = vadd.f32 %v1453, %v1757
        %v1759 = vpop.f32.mrf.mxu0
        %1760 = vmatprep.mubr.bf16.mxu0 %v731
        %1761 = vmatmul.mubr.bf16.gmra.mxu0 %v654
        %v1762 = vpop.f32.mrf.mxu0
        %v1763 = vadd.f32 %v1458, %v1762
        %v1764 = vpop.f32.mrf.mxu0
        %v1765 = vpop.f32.mrf.mxu0
        %v1766 = vadd.f32 %v1461, %v1765
        %v1767 = vpop.f32.mrf.mxu0
        %1768 = vmatprep.mubr.bf16.mxu0 %v743
        %1769 = vmatmul.mubr.bf16.gmra.mxu0 %v655
        %v1770 = vpop.f32.mrf.mxu0
        %v1771 = vadd.f32 %v1466, %v1770
        %v1772 = vpop.f32.mrf.mxu0
        %v1773 = vpop.f32.mrf.mxu0
        %v1774 = vadd.f32 %v1469, %v1773
        %v1775 = vpop.f32.mrf.mxu0
        %1776 = vmatprep.mubr.bf16.mxu0 %v755
        %1777 = vmatmul.mubr.bf16.gmra.mxu0 %v656
        %v1778 = vpop.f32.mrf.mxu0
        %v1779 = vadd.f32 %v1474, %v1778
        %v1780 = vpop.f32.mrf.mxu0
        %v1781 = vpop.f32.mrf.mxu0
        %v1782 = vadd.f32 %v1477, %v1781
        %v1783 = vpop.f32.mrf.mxu0
        %1784 = vmatprep.mubr.bf16.mxu0 %v767
        %1785 = vmatmul.mubr.bf16.gmra.mxu0 %v657
        %v1786 = vpop.f32.mrf.mxu0
        %v1787 = vadd.f32 %v1482, %v1786
        %v1788 = vpop.f32.mrf.mxu0
        %v1789 = vpop.f32.mrf.mxu0
        %v1790 = vadd.f32 %v1485, %v1789
        %v1791 = vpop.f32.mrf.mxu0
        %1792 = vmatprep.mubr.bf16.mxu0 %v779
        %1793 = vmatmul.mubr.bf16.gmra.mxu0 %v658
        %v1794 = vpop.f32.mrf.mxu0
        %v1795 = vadd.f32 %v1490, %v1794
        %v1796 = vpop.f32.mrf.mxu0
        %v1797 = vpop.f32.mrf.mxu0
        %v1798 = vadd.f32 %v1493, %v1797
        %v1799 = vpop.f32.mrf.mxu0
        %1800 = vmatprep.mubr.bf16.mxu0 %v791
        %1801 = vmatmul.mubr.bf16.gmra.mxu0 %v659
        %v1802 = vpop.f32.mrf.mxu0
        %v1803 = vadd.f32 %v1498, %v1802
        %v1804 = vpop.f32.mrf.mxu0
        %v1805 = vpop.f32.mrf.mxu0
        %v1806 = vadd.f32 %v1501, %v1805
        %v1807 = vpop.f32.mrf.mxu0
        %1808 = vmatprep.mubr.bf16.mxu0 %v803
        %1809 = vmatmul.mubr.bf16.gmra.mxu0 %v660
        %v1810 = vpop.f32.mrf.mxu0
        %v1811 = vadd.f32 %v1506, %v1810
        %v1812 = vpop.f32.mrf.mxu0
        %v1813 = vpop.f32.mrf.mxu0
        %v1814 = vadd.f32 %v1509, %v1813
        %v1815 = vpop.f32.mrf.mxu0
        %1816 = vmatprep.mubr.bf16.mxu0 %v815
        %1817 = vmatmul.mubr.bf16.gmra.mxu0 %v661
        %v1818 = vpop.f32.mrf.mxu0
        %v1819 = vadd.f32 %v1514, %v1818
        %v1820 = vpop.f32.mrf.mxu0
        %v1821 = vpop.f32.mrf.mxu0
        %v1822 = vadd.f32 %v1517, %v1821
        %v1823 = vpop.f32.mrf.mxu0
        %1824 = vmatprep.mubr.bf16.mxu0 %v827
        %1825 = vmatmul.mubr.bf16.gmra.mxu0 %v662
        %v1826 = vpop.f32.mrf.mxu0
        %v1827 = vadd.f32 %v1522, %v1826
        %v1828 = vpop.f32.mrf.mxu0
        %v1829 = vpop.f32.mrf.mxu0
        %v1830 = vadd.f32 %v1525, %v1829
        %v1831 = vpop.f32.mrf.mxu0
        %1832 = vmatprep.mubr.bf16.mxu0 %v839
        %1833 = vmatmul.mubr.bf16.gmra.mxu0 %v663
        %v1834 = vpop.f32.mrf.mxu0
        %v1835 = vadd.f32 %v1530, %v1834
        %v1836 = vpop.f32.mrf.mxu0
        %v1837 = vpop.f32.mrf.mxu0
        %v1838 = vadd.f32 %v1533, %v1837
        %v1839 = vpop.f32.mrf.mxu0
        %1840 = vmatprep.mubr.bf16.mxu0 %v851
        %1841 = vmatmul.mubr.bf16.gmra.mxu0 %v664
        %v1842 = vpop.f32.mrf.mxu0
        %v1843 = vadd.f32 %v1538, %v1842
        %v1844 = vpop.f32.mrf.mxu0
        %v1845 = vpop.f32.mrf.mxu0
        %v1846 = vadd.f32 %v1541, %v1845
        %v1847 = vpop.f32.mrf.mxu0
        %1848 = vmatprep.mubr.bf16.mxu0 %v863
        %1849 = vmatmul.mubr.bf16.gmra.mxu0 %v665
        %v1850 = vpop.f32.mrf.mxu0
        %v1851 = vadd.f32 %v1546, %v1850
        %v1852 = vpop.f32.mrf.mxu0
        %v1853 = vpop.f32.mrf.mxu0
        %v1854 = vadd.f32 %v1549, %v1853
        %v1855 = vpop.f32.mrf.mxu0
        %1856 = vdwg.mxu0
        %1857 = vmatprep.subr.bf16.mxu0 0
        %1858 = vmatpush1.bf16.msra.mxu0 %v1671
        %1859 = vmatprep.subr.bf16.mxu0 0
        %1860 = vmatpush1.bf16.msra.mxu0 %v1670
        %1861 = vmatprep.subr.bf16.mxu0 0
        %1862 = vmatpush1.bf16.msra.mxu0 %v1669
        %1863 = vmatprep.subr.bf16.mxu0 0
        %1864 = vmatpush1.bf16.msra.mxu0 %v1668
        %1865 = vmatprep.subr.bf16.mxu0 0
        %1866 = vmatpush1.bf16.msra.mxu0 %v1667
        %1867 = vmatprep.subr.bf16.mxu0 0
        %1868 = vmatpush1.bf16.msra.mxu0 %v1666
        %1869 = vmatprep.subr.bf16.mxu0 0
        %1870 = vmatpush1.bf16.msra.mxu0 %v1665
        %1871 = vmatprep.subr.bf16.mxu0 0
        %1872 = vmatpush1.bf16.msra.mxu0 %v1664
        %1873 = vmatprep.subr.bf16.mxu0 0
        %1874 = vmatpush2.bf16.msra.mxu0 0
        %1875 = vmatprep.subr.bf16.mxu0 0
        %1876 = vmatpush2.bf16.msra.mxu0 0
        %1877 = vmatprep.subr.bf16.mxu0 0
        %1878 = vmatpush2.bf16.msra.mxu0 0
        %1879 = vmatprep.subr.bf16.mxu0 0
        %1880 = vmatpush2.bf16.msra.mxu0 0
        %1881 = vmatprep.subr.bf16.mxu0 0
        %1882 = vmatpush2.bf16.msra.mxu0 0
        %1883 = vmatprep.subr.bf16.mxu0 0
        %1884 = vmatpush2.bf16.msra.mxu0 0
        %1885 = vmatprep.subr.bf16.mxu0 0
        %1886 = vmatpush2.bf16.msra.mxu0 0
        %1887 = vmatprep.subr.bf16.mxu0 0
        %1888 = vmatpush2.bf16.msra.mxu0 0
        %1889 = vmatprep.mubr.bf16.mxu0 0
        %1890 = vmatmul.mubr.bf16.gmra.mxu0 %v912
        %v1891 = vpop.f32.mrf.mxu0
        %v1892 = vadd.f32 %v1731, %v1891
        %v1893 = vpop.f32.mrf.mxu0
        %v1894 = vpop.f32.mrf.mxu0
        %v1895 = vadd.f32 %v1734, %v1894
        %v1896 = vpop.f32.mrf.mxu0
        %1897 = vmatprep.mubr.bf16.mxu0 0
        %1898 = vmatmul.mubr.bf16.gmra.mxu0 %v915
        %v1899 = vpop.f32.mrf.mxu0
        %v1900 = vadd.f32 %v1739, %v1899
        %v1901 = vpop.f32.mrf.mxu0
        %v1902 = vpop.f32.mrf.mxu0
        %v1903 = vadd.f32 %v1742, %v1902
        %v1904 = vpop.f32.mrf.mxu0
        %1905 = vmatprep.mubr.bf16.mxu0 0
        %1906 = vmatmul.mubr.bf16.gmra.mxu0 %v912
        %v1907 = vpop.f32.mrf.mxu0
        %v1908 = vadd.f32 %v1747, %v1907
        %v1909 = vpop.f32.mrf.mxu0
        %v1910 = vpop.f32.mrf.mxu0
        %v1911 = vadd.f32 %v1750, %v1910
        %v1912 = vpop.f32.mrf.mxu0
        %1913 = vmatprep.mubr.bf16.mxu0 0
        %1914 = vmatmul.mubr.bf16.gmra.mxu0 %v918
        %v1915 = vpop.f32.mrf.mxu0
        %v1916 = vadd.f32 %v1755, %v1915
        %v1917 = vpop.f32.mrf.mxu0
        %v1918 = vpop.f32.mrf.mxu0
        %v1919 = vadd.f32 %v1758, %v1918
        %v1920 = vpop.f32.mrf.mxu0
        %1921 = vmatprep.mubr.bf16.mxu0 0
        %1922 = vmatmul.mubr.bf16.gmra.mxu0 %v921
        %v1923 = vpop.f32.mrf.mxu0
        %v1924 = vadd.f32 %v1763, %v1923
        %v1925 = vpop.f32.mrf.mxu0
        %v1926 = vpop.f32.mrf.mxu0
        %v1927 = vadd.f32 %v1766, %v1926
        %v1928 = vpop.f32.mrf.mxu0
        %1929 = vmatprep.mubr.bf16.mxu0 0
        %1930 = vmatmul.mubr.bf16.gmra.mxu0 %v924
        %v1931 = vpop.f32.mrf.mxu0
        %v1932 = vadd.f32 %v1771, %v1931
        %v1933 = vpop.f32.mrf.mxu0
        %v1934 = vpop.f32.mrf.mxu0
        %v1935 = vadd.f32 %v1774, %v1934
        %v1936 = vpop.f32.mrf.mxu0
        %1937 = vmatprep.mubr.bf16.mxu0 0
        %1938 = vmatmul.mubr.bf16.gmra.mxu0 %v927
        %v1939 = vpop.f32.mrf.mxu0
        %v1940 = vadd.f32 %v1779, %v1939
        %v1941 = vpop.f32.mrf.mxu0
        %v1942 = vpop.f32.mrf.mxu0
        %v1943 = vadd.f32 %v1782, %v1942
        %v1944 = vpop.f32.mrf.mxu0
        %1945 = vmatprep.mubr.bf16.mxu0 0
        %1946 = vmatmul.mubr.bf16.gmra.mxu0 %v930
        %v1947 = vpop.f32.mrf.mxu0
        %v1948 = vadd.f32 %v1787, %v1947
        %v1949 = vpop.f32.mrf.mxu0
        %v1950 = vpop.f32.mrf.mxu0
        %v1951 = vadd.f32 %v1790, %v1950
        %v1952 = vpop.f32.mrf.mxu0
        %1953 = vmatprep.mubr.bf16.mxu0 0
        %1954 = vmatmul.mubr.bf16.gmra.mxu0 %v933
        %v1955 = vpop.f32.mrf.mxu0
        %v1956 = vadd.f32 %v1795, %v1955
        %v1957 = vpop.f32.mrf.mxu0
        %v1958 = vpop.f32.mrf.mxu0
        %v1959 = vadd.f32 %v1798, %v1958
        %v1960 = vpop.f32.mrf.mxu0
        %1961 = vmatprep.mubr.bf16.mxu0 0
        %1962 = vmatmul.mubr.bf16.gmra.mxu0 %v936
        %v1963 = vpop.f32.mrf.mxu0
        %v1964 = vadd.f32 %v1803, %v1963
        %v1965 = vpop.f32.mrf.mxu0
        %v1966 = vpop.f32.mrf.mxu0
        %v1967 = vadd.f32 %v1806, %v1966
        %v1968 = vpop.f32.mrf.mxu0
        %1969 = vmatprep.mubr.bf16.mxu0 0
        %1970 = vmatmul.mubr.bf16.gmra.mxu0 %v939
        %v1971 = vpop.f32.mrf.mxu0
        %v1972 = vadd.f32 %v1811, %v1971
        %v1973 = vpop.f32.mrf.mxu0
        %v1974 = vpop.f32.mrf.mxu0
        %v1975 = vadd.f32 %v1814, %v1974
        %v1976 = vpop.f32.mrf.mxu0
        %1977 = vmatprep.mubr.bf16.mxu0 0
        %1978 = vmatmul.mubr.bf16.gmra.mxu0 %v942
        %v1979 = vpop.f32.mrf.mxu0
        %v1980 = vadd.f32 %v1819, %v1979
        %v1981 = vpop.f32.mrf.mxu0
        %v1982 = vpop.f32.mrf.mxu0
        %v1983 = vadd.f32 %v1822, %v1982
        %v1984 = vpop.f32.mrf.mxu0
        %1985 = vmatprep.mubr.bf16.mxu0 0
        %1986 = vmatmul.mubr.bf16.gmra.mxu0 %v945
        %v1987 = vpop.f32.mrf.mxu0
        %v1988 = vadd.f32 %v1827, %v1987
        %v1989 = vpop.f32.mrf.mxu0
        %v1990 = vpop.f32.mrf.mxu0
        %v1991 = vadd.f32 %v1830, %v1990
        %v1992 = vpop.f32.mrf.mxu0
        %1993 = vmatprep.mubr.bf16.mxu0 0
        %1994 = vmatmul.mubr.bf16.gmra.mxu0 %v948
        %v1995 = vpop.f32.mrf.mxu0
        %v1996 = vadd.f32 %v1835, %v1995
        %v1997 = vpop.f32.mrf.mxu0
        %v1998 = vpop.f32.mrf.mxu0
        %v1999 = vadd.f32 %v1838, %v1998
        %v2000 = vpop.f32.mrf.mxu0
        %2001 = vmatprep.mubr.bf16.mxu0 0
        %2002 = vmatmul.mubr.bf16.gmra.mxu0 %v951
        %v2003 = vpop.f32.mrf.mxu0
        %v2004 = vadd.f32 %v1843, %v2003
        %v2005 = vpop.f32.mrf.mxu0
        %v2006 = vpop.f32.mrf.mxu0
        %v2007 = vadd.f32 %v1846, %v2006
        %v2008 = vpop.f32.mrf.mxu0
        %2009 = vmatprep.mubr.bf16.mxu0 0
        %2010 = vmatmul.mubr.bf16.gmra.mxu0 %v954
        %v2011 = vpop.f32.mrf.mxu0
        %v2012 = vadd.f32 %v1851, %v2011
        %v2013 = vpop.f32.mrf.mxu0
        %v2014 = vpop.f32.mrf.mxu0
        %v2015 = vadd.f32 %v1854, %v2014
        %v2016 = vpop.f32.mrf.mxu0
        %2017 = vdwg.mxu0
        %s2018 = scalar_lea.vmem [#allocation5], 384
        %v2019 = vld [vmem:[%s2018] sm:$0xf]
        %v2020 = vld [vmem:[%s2018 + $0x4] sm:$0xf]
        %v2021 = vld [vmem:[%s2018 + $0x8] sm:$0xf]
        %v2022 = vld [vmem:[%s2018 + $0xc] sm:$0xf]
        %v2023 = vld [vmem:[%s2018 + $0x10] sm:$0xf]
        %v2024 = vld [vmem:[%s2018 + $0x14] sm:$0xf]
        %v2025 = vld [vmem:[%s2018 + $0x18] sm:$0xf]
        %v2026 = vld [vmem:[%s2018 + $0x1c] sm:$0xf]
        %v2027 = vld [vmem:[%s2018 + $0x20] sm:$0xf]
        %v2028 = vld [vmem:[%s2018 + $0x24] sm:$0xf]
        %v2029 = vld [vmem:[%s2018 + $0x28] sm:$0xf]
        %v2030 = vld [vmem:[%s2018 + $0x2c] sm:$0xf]
        %v2031 = vld [vmem:[%s2018 + $0x30] sm:$0xf]
        %v2032 = vld [vmem:[%s2018 + $0x34] sm:$0xf]
        %v2033 = vld [vmem:[%s2018 + $0x38] sm:$0xf]
        %v2034 = vld [vmem:[%s2018 + $0x3c] sm:$0xf]
        %v2035 = vld [vmem:[%s2018 + $0x40] sm:$0xf]
        %v2036 = vld [vmem:[%s2018 + $0x44] sm:$0xf]
        %v2037 = vld [vmem:[%s2018 + $0x48] sm:$0xf]
        %v2038 = vld [vmem:[%s2018 + $0x4c] sm:$0xf]
        %v2039 = vld [vmem:[%s2018 + $0x50] sm:$0xf]
        %v2040 = vld [vmem:[%s2018 + $0x54] sm:$0xf]
        %v2041 = vld [vmem:[%s2018 + $0x58] sm:$0xf]
        %v2042 = vld [vmem:[%s2018 + $0x5c] sm:$0xf]
        %v2043 = vld [vmem:[%s2018 + $0x60] sm:$0xf]
        %v2044 = vld [vmem:[%s2018 + $0x64] sm:$0xf]
        %v2045 = vld [vmem:[%s2018 + $0x68] sm:$0xf]
        %v2046 = vld [vmem:[%s2018 + $0x6c] sm:$0xf]
        %v2047 = vld [vmem:[%s2018 + $0x70] sm:$0xf]
        %v2048 = vld [vmem:[%s2018 + $0x74] sm:$0xf]
        %v2049 = vld [vmem:[%s2018 + $0x78] sm:$0xf]
        %v2050 = vld [vmem:[%s2018 + $0x7c] sm:$0xf]
        %v2051 = vld [vmem:[%s2018 + $0x80] sm:$0xf]
        %v2052 = vld [vmem:[%s2018 + $0x84] sm:$0xf]
        %v2053 = vld [vmem:[%s2018 + $0x88] sm:$0xf]
        %v2054 = vld [vmem:[%s2018 + $0x8c] sm:$0xf]
        %v2055 = vld [vmem:[%s2018 + $0x90] sm:$0xf]
        %v2056 = vld [vmem:[%s2018 + $0x94] sm:$0xf]
        %v2057 = vld [vmem:[%s2018 + $0x98] sm:$0xf]
        %v2058 = vld [vmem:[%s2018 + $0x9c] sm:$0xf]
        %v2059 = vld [vmem:[%s2018 + $0xa0] sm:$0xf]
        %v2060 = vld [vmem:[%s2018 + $0xa4] sm:$0xf]
        %v2061 = vld [vmem:[%s2018 + $0xa8] sm:$0xf]
        %v2062 = vld [vmem:[%s2018 + $0xac] sm:$0xf]
        %v2063 = vld [vmem:[%s2018 + $0xb0] sm:$0xf]
        %v2064 = vld [vmem:[%s2018 + $0xb4] sm:$0xf]
        %v2065 = vld [vmem:[%s2018 + $0xb8] sm:$0xf]
        %v2066 = vld [vmem:[%s2018 + $0xbc] sm:$0xf]
        %v2115 = vunpack.c.l.b16 %v2019
        %v2116 = vunpack.c.l.b16 %v2020
        %v2117 = vunpack.c.l.b16 %v2021
        %v2118 = vunpack.c.l.b16 %v2022
        %v2119 = vunpack.c.l.b16 %v2023
        %v2120 = vunpack.c.l.b16 %v2024
        %v2121 = vunpack.c.l.b16 %v2025
        %v2122 = vunpack.c.l.b16 %v2026
        %v2123 = vunpack.c.l.b16 %v2027
        %v2124 = vunpack.c.l.b16 %v2028
        %v2125 = vunpack.c.l.b16 %v2029
        %v2126 = vunpack.c.l.b16 %v2030
        %v2127 = vunpack.c.l.b16 %v2031
        %v2128 = vunpack.c.l.b16 %v2032
        %v2129 = vunpack.c.l.b16 %v2033
        %v2130 = vunpack.c.l.b16 %v2034
        %v2131 = vunpack.c.l.b16 %v2035
        %v2132 = vunpack.c.l.b16 %v2036
        %v2133 = vunpack.c.l.b16 %v2037
        %v2134 = vunpack.c.l.b16 %v2038
        %v2135 = vunpack.c.l.b16 %v2039
        %v2136 = vunpack.c.l.b16 %v2040
        %v2137 = vunpack.c.l.b16 %v2041
        %v2138 = vunpack.c.l.b16 %v2042
        %v2139 = vunpack.c.l.b16 %v2043
        %v2140 = vunpack.c.l.b16 %v2044
        %v2141 = vunpack.c.l.b16 %v2045
        %v2142 = vunpack.c.l.b16 %v2046
        %v2143 = vunpack.c.l.b16 %v2047
        %v2144 = vunpack.c.l.b16 %v2048
        %v2145 = vunpack.c.l.b16 %v2049
        %v2146 = vunpack.c.l.b16 %v2050
        %v2147 = vunpack.c.l.b16 %v2051
        %v2148 = vunpack.c.l.b16 %v2052
        %v2149 = vunpack.c.l.b16 %v2053
        %v2150 = vunpack.c.l.b16 %v2054
        %v2151 = vunpack.c.l.b16 %v2055
        %v2152 = vunpack.c.l.b16 %v2056
        %v2153 = vunpack.c.l.b16 %v2057
        %v2154 = vunpack.c.l.b16 %v2058
        %v2155 = vunpack.c.l.b16 %v2059
        %v2156 = vunpack.c.l.b16 %v2060
        %v2157 = vunpack.c.l.b16 %v2061
        %v2158 = vunpack.c.l.b16 %v2062
        %v2159 = vunpack.c.l.b16 %v2063
        %v2160 = vunpack.c.l.b16 %v2064
        %v2161 = vunpack.c.l.b16 %v2065
        %v2162 = vunpack.c.l.b16 %v2066
        %v2163 = vpack.c.b16 %v2116, %v2115
        %v2164 = vpack.c.b16 %v2118, %v2117
        %v2165 = vpack.c.b16 %v2120, %v2119
        %v2166 = vpack.c.b16 %v2122, %v2121
        %v2167 = vpack.c.b16 %v2124, %v2123
        %v2168 = vpack.c.b16 %v2126, %v2125
        %v2169 = vpack.c.b16 %v2128, %v2127
        %v2170 = vpack.c.b16 %v2130, %v2129
        %v2171 = vpack.c.b16 %v2132, %v2131
        %v2172 = vpack.c.b16 %v2134, %v2133
        %v2173 = vpack.c.b16 %v2136, %v2135
        %v2174 = vpack.c.b16 %v2138, %v2137
        %v2175 = vpack.c.b16 %v2140, %v2139
        %v2176 = vpack.c.b16 %v2142, %v2141
        %v2177 = vpack.c.b16 %v2144, %v2143
        %v2178 = vpack.c.b16 %v2146, %v2145
        %v2179 = vpack.c.b16 %v2148, %v2147
        %v2180 = vpack.c.b16 %v2150, %v2149
        %v2181 = vpack.c.b16 %v2152, %v2151
        %v2182 = vpack.c.b16 %v2154, %v2153
        %v2183 = vpack.c.b16 %v2156, %v2155
        %v2184 = vpack.c.b16 %v2158, %v2157
        %v2185 = vpack.c.b16 %v2160, %v2159
        %v2186 = vpack.c.b16 %v2162, %v2161
        %2211 = vmatprep.subr.bf16.mxu0 0
        %2212 = vmatpush1.bf16.msra.mxu0 %v2170
        %2213 = vmatprep.subr.bf16.mxu0 0
        %2214 = vmatpush1.bf16.msra.mxu0 %v2169
        %2215 = vmatprep.subr.bf16.mxu0 0
        %2216 = vmatpush1.bf16.msra.mxu0 %v2168
        %2217 = vmatprep.subr.bf16.mxu0 0
        %2218 = vmatpush1.bf16.msra.mxu0 %v2167
        %2219 = vmatprep.subr.bf16.mxu0 0
        %2220 = vmatpush1.bf16.msra.mxu0 %v2166
        %2221 = vmatprep.subr.bf16.mxu0 0
        %2222 = vmatpush1.bf16.msra.mxu0 %v2165
        %2223 = vmatprep.subr.bf16.mxu0 0
        %2224 = vmatpush1.bf16.msra.mxu0 %v2164
        %2225 = vmatprep.subr.bf16.mxu0 0
        %2226 = vmatpush1.bf16.msra.mxu0 %v2163
        %2227 = vmatprep.subr.bf16.mxu0 0
        %2228 = vmatpush2.bf16.msra.mxu0 %v2178
        %2229 = vmatprep.subr.bf16.mxu0 0
        %2230 = vmatpush2.bf16.msra.mxu0 %v2177
        %2231 = vmatprep.subr.bf16.mxu0 0
        %2232 = vmatpush2.bf16.msra.mxu0 %v2176
        %2233 = vmatprep.subr.bf16.mxu0 0
        %2234 = vmatpush2.bf16.msra.mxu0 %v2175
        %2235 = vmatprep.subr.bf16.mxu0 0
        %2236 = vmatpush2.bf16.msra.mxu0 %v2174
        %2237 = vmatprep.subr.bf16.mxu0 0
        %2238 = vmatpush2.bf16.msra.mxu0 %v2173
        %2239 = vmatprep.subr.bf16.mxu0 0
        %2240 = vmatpush2.bf16.msra.mxu0 %v2172
        %2241 = vmatprep.subr.bf16.mxu0 0
        %2242 = vmatpush2.bf16.msra.mxu0 %v2171
        %2243 = vmatprep.mubr.bf16.mxu0 %v695
        %2244 = vmatmul.mubr.bf16.gmra.mxu0 %v651
        %v2245 = vpop.f32.mrf.mxu0
        %v2246 = vadd.f32 0.0, %v2245
        %v2247 = vpop.f32.mrf.mxu0
        %v2248 = vpop.f32.mrf.mxu0
        %v2249 = vadd.f32 0.0, %v2248
        %v2250 = vpop.f32.mrf.mxu0
        %2251 = vmatprep.mubr.bf16.mxu0 %v719
        %2252 = vmatmul.mubr.bf16.gmra.mxu0 %v653
        %v2253 = vpop.f32.mrf.mxu0
        %v2254 = vadd.f32 0.0, %v2253
        %v2255 = vpop.f32.mrf.mxu0
        %v2256 = vpop.f32.mrf.mxu0
        %v2257 = vadd.f32 0.0, %v2256
        %v2258 = vpop.f32.mrf.mxu0
        %2259 = vmatprep.mubr.bf16.mxu0 %v731
        %2260 = vmatmul.mubr.bf16.gmra.mxu0 %v654
        %v2261 = vpop.f32.mrf.mxu0
        %v2262 = vadd.f32 0.0, %v2261
        %v2263 = vpop.f32.mrf.mxu0
        %v2264 = vpop.f32.mrf.mxu0
        %v2265 = vadd.f32 0.0, %v2264
        %v2266 = vpop.f32.mrf.mxu0
        %2267 = vmatprep.mubr.bf16.mxu0 %v743
        %2268 = vmatmul.mubr.bf16.gmra.mxu0 %v655
        %v2269 = vpop.f32.mrf.mxu0
        %v2270 = vadd.f32 0.0, %v2269
        %v2271 = vpop.f32.mrf.mxu0
        %v2272 = vpop.f32.mrf.mxu0
        %v2273 = vadd.f32 0.0, %v2272
        %v2274 = vpop.f32.mrf.mxu0
        %2275 = vmatprep.mubr.bf16.mxu0 %v755
        %2276 = vmatmul.mubr.bf16.gmra.mxu0 %v656
        %v2277 = vpop.f32.mrf.mxu0
        %v2278 = vadd.f32 0.0, %v2277
        %v2279 = vpop.f32.mrf.mxu0
        %v2280 = vpop.f32.mrf.mxu0
        %v2281 = vadd.f32 0.0, %v2280
        %v2282 = vpop.f32.mrf.mxu0
        %2283 = vmatprep.mubr.bf16.mxu0 %v767
        %2284 = vmatmul.mubr.bf16.gmra.mxu0 %v657
        %v2285 = vpop.f32.mrf.mxu0
        %v2286 = vadd.f32 0.0, %v2285
        %v2287 = vpop.f32.mrf.mxu0
        %v2288 = vpop.f32.mrf.mxu0
        %v2289 = vadd.f32 0.0, %v2288
        %v2290 = vpop.f32.mrf.mxu0
        %2291 = vmatprep.mubr.bf16.mxu0 %v779
        %2292 = vmatmul.mubr.bf16.gmra.mxu0 %v658
        %v2293 = vpop.f32.mrf.mxu0
        %v2294 = vadd.f32 0.0, %v2293
        %v2295 = vpop.f32.mrf.mxu0
        %v2296 = vpop.f32.mrf.mxu0
        %v2297 = vadd.f32 0.0, %v2296
        %v2298 = vpop.f32.mrf.mxu0
        %2299 = vmatprep.mubr.bf16.mxu0 %v791
        %2300 = vmatmul.mubr.bf16.gmra.mxu0 %v659
        %v2301 = vpop.f32.mrf.mxu0
        %v2302 = vadd.f32 0.0, %v2301
        %v2303 = vpop.f32.mrf.mxu0
        %v2304 = vpop.f32.mrf.mxu0
        %v2305 = vadd.f32 0.0, %v2304
        %v2306 = vpop.f32.mrf.mxu0
        %2307 = vmatprep.mubr.bf16.mxu0 %v803
        %2308 = vmatmul.mubr.bf16.gmra.mxu0 %v660
        %v2309 = vpop.f32.mrf.mxu0
        %v2310 = vadd.f32 0.0, %v2309
        %v2311 = vpop.f32.mrf.mxu0
        %v2312 = vpop.f32.mrf.mxu0
        %v2313 = vadd.f32 0.0, %v2312
        %v2314 = vpop.f32.mrf.mxu0
        %2315 = vmatprep.mubr.bf16.mxu0 %v815
        %2316 = vmatmul.mubr.bf16.gmra.mxu0 %v661
        %v2317 = vpop.f32.mrf.mxu0
        %v2318 = vadd.f32 0.0, %v2317
        %v2319 = vpop.f32.mrf.mxu0
        %v2320 = vpop.f32.mrf.mxu0
        %v2321 = vadd.f32 0.0, %v2320
        %v2322 = vpop.f32.mrf.mxu0
        %2323 = vmatprep.mubr.bf16.mxu0 %v827
        %2324 = vmatmul.mubr.bf16.gmra.mxu0 %v662
        %v2325 = vpop.f32.mrf.mxu0
        %v2326 = vadd.f32 0.0, %v2325
        %v2327 = vpop.f32.mrf.mxu0
        %v2328 = vpop.f32.mrf.mxu0
        %v2329 = vadd.f32 0.0, %v2328
        %v2330 = vpop.f32.mrf.mxu0
        %2331 = vmatprep.mubr.bf16.mxu0 %v839
        %2332 = vmatmul.mubr.bf16.gmra.mxu0 %v663
        %v2333 = vpop.f32.mrf.mxu0
        %v2334 = vadd.f32 0.0, %v2333
        %v2335 = vpop.f32.mrf.mxu0
        %v2336 = vpop.f32.mrf.mxu0
        %v2337 = vadd.f32 0.0, %v2336
        %v2338 = vpop.f32.mrf.mxu0
        %2339 = vmatprep.mubr.bf16.mxu0 %v851
        %2340 = vmatmul.mubr.bf16.gmra.mxu0 %v664
        %v2341 = vpop.f32.mrf.mxu0
        %v2342 = vadd.f32 0.0, %v2341
        %v2343 = vpop.f32.mrf.mxu0
        %v2344 = vpop.f32.mrf.mxu0
        %v2345 = vadd.f32 0.0, %v2344
        %v2346 = vpop.f32.mrf.mxu0
        %2347 = vmatprep.mubr.bf16.mxu0 %v863
        %2348 = vmatmul.mubr.bf16.gmra.mxu0 %v665
        %v2349 = vpop.f32.mrf.mxu0
        %v2350 = vadd.f32 0.0, %v2349
        %v2351 = vpop.f32.mrf.mxu0
        %v2352 = vpop.f32.mrf.mxu0
        %v2353 = vadd.f32 0.0, %v2352
        %v2354 = vpop.f32.mrf.mxu0
        %2355 = vmatprep.mubr.bf16.mxu0 %v1029
        %2356 = vmatmul.mubr.bf16.gmra.mxu0 %v666
        %v2357 = vpop.f32.mrf.mxu0
        %v2358 = vadd.f32 0.0, %v2357
        %v2359 = vpop.f32.mrf.mxu0
        %v2360 = vpop.f32.mrf.mxu0
        %v2361 = vadd.f32 0.0, %v2360
        %v2362 = vpop.f32.mrf.mxu0
        %2363 = vmatprep.mubr.bf16.mxu0 %v863
        %2364 = vmatmul.mubr.bf16.gmra.mxu0 %v665
        %v2365 = vpop.f32.mrf.mxu0
        %v2366 = vadd.f32 0.0, %v2365
        %v2367 = vpop.f32.mrf.mxu0
        %v2368 = vpop.f32.mrf.mxu0
        %v2369 = vadd.f32 0.0, %v2368
        %v2370 = vpop.f32.mrf.mxu0
        %2371 = vdwg.mxu0
        %2372 = vmatprep.subr.bf16.mxu0 0
        %2373 = vmatpush1.bf16.msra.mxu0 %v2186
        %2374 = vmatprep.subr.bf16.mxu0 0
        %2375 = vmatpush1.bf16.msra.mxu0 %v2185
        %2376 = vmatprep.subr.bf16.mxu0 0
        %2377 = vmatpush1.bf16.msra.mxu0 %v2184
        %2378 = vmatprep.subr.bf16.mxu0 0
        %2379 = vmatpush1.bf16.msra.mxu0 %v2183
        %2380 = vmatprep.subr.bf16.mxu0 0
        %2381 = vmatpush1.bf16.msra.mxu0 %v2182
        %2382 = vmatprep.subr.bf16.mxu0 0
        %2383 = vmatpush1.bf16.msra.mxu0 %v2181
        %2384 = vmatprep.subr.bf16.mxu0 0
        %2385 = vmatpush1.bf16.msra.mxu0 %v2180
        %2386 = vmatprep.subr.bf16.mxu0 0
        %2387 = vmatpush1.bf16.msra.mxu0 %v2179
        %2388 = vmatprep.subr.bf16.mxu0 0
        %2389 = vmatpush2.bf16.msra.mxu0 0
        %2390 = vmatprep.subr.bf16.mxu0 0
        %2391 = vmatpush2.bf16.msra.mxu0 0
        %2392 = vmatprep.subr.bf16.mxu0 0
        %2393 = vmatpush2.bf16.msra.mxu0 0
        %2394 = vmatprep.subr.bf16.mxu0 0
        %2395 = vmatpush2.bf16.msra.mxu0 0
        %2396 = vmatprep.subr.bf16.mxu0 0
        %2397 = vmatpush2.bf16.msra.mxu0 0
        %2398 = vmatprep.subr.bf16.mxu0 0
        %2399 = vmatpush2.bf16.msra.mxu0 0
        %2400 = vmatprep.subr.bf16.mxu0 0
        %2401 = vmatpush2.bf16.msra.mxu0 0
        %2402 = vmatprep.subr.bf16.mxu0 0
        %2403 = vmatpush2.bf16.msra.mxu0 0
        %2404 = vmatprep.mubr.bf16.mxu0 0
        %2405 = vmatmul.mubr.bf16.gmra.mxu0 %v912
        %v2406 = vpop.f32.mrf.mxu0
        %v2407 = vadd.f32 %v2246, %v2406
        %v2408 = vpop.f32.mrf.mxu0
        %v2409 = vpop.f32.mrf.mxu0
        %v2410 = vadd.f32 %v2249, %v2409
        %v2411 = vpop.f32.mrf.mxu0
        %2412 = vmatprep.mubr.bf16.mxu0 0
        %2413 = vmatmul.mubr.bf16.gmra.mxu0 %v918
        %v2414 = vpop.f32.mrf.mxu0
        %v2415 = vadd.f32 %v2254, %v2414
        %v2416 = vpop.f32.mrf.mxu0
        %v2417 = vpop.f32.mrf.mxu0
        %v2418 = vadd.f32 %v2257, %v2417
        %v2419 = vpop.f32.mrf.mxu0
        %2420 = vmatprep.mubr.bf16.mxu0 0
        %2421 = vmatmul.mubr.bf16.gmra.mxu0 %v921
        %v2422 = vpop.f32.mrf.mxu0
        %v2423 = vadd.f32 %v2262, %v2422
        %v2424 = vpop.f32.mrf.mxu0
        %v2425 = vpop.f32.mrf.mxu0
        %v2426 = vadd.f32 %v2265, %v2425
        %v2427 = vpop.f32.mrf.mxu0
        %2428 = vmatprep.mubr.bf16.mxu0 0
        %2429 = vmatmul.mubr.bf16.gmra.mxu0 %v924
        %v2430 = vpop.f32.mrf.mxu0
        %v2431 = vadd.f32 %v2270, %v2430
        %v2432 = vpop.f32.mrf.mxu0
        %v2433 = vpop.f32.mrf.mxu0
        %v2434 = vadd.f32 %v2273, %v2433
        %v2435 = vpop.f32.mrf.mxu0
        %2436 = vmatprep.mubr.bf16.mxu0 0
        %2437 = vmatmul.mubr.bf16.gmra.mxu0 %v927
        %v2438 = vpop.f32.mrf.mxu0
        %v2439 = vadd.f32 %v2278, %v2438
        %v2440 = vpop.f32.mrf.mxu0
        %v2441 = vpop.f32.mrf.mxu0
        %v2442 = vadd.f32 %v2281, %v2441
        %v2443 = vpop.f32.mrf.mxu0
        %2444 = vmatprep.mubr.bf16.mxu0 0
        %2445 = vmatmul.mubr.bf16.gmra.mxu0 %v930
        %v2446 = vpop.f32.mrf.mxu0
        %v2447 = vadd.f32 %v2286, %v2446
        %v2448 = vpop.f32.mrf.mxu0
        %v2449 = vpop.f32.mrf.mxu0
        %v2450 = vadd.f32 %v2289, %v2449
        %v2451 = vpop.f32.mrf.mxu0
        %2452 = vmatprep.mubr.bf16.mxu0 0
        %2453 = vmatmul.mubr.bf16.gmra.mxu0 %v933
        %v2454 = vpop.f32.mrf.mxu0
        %v2455 = vadd.f32 %v2294, %v2454
        %v2456 = vpop.f32.mrf.mxu0
        %v2457 = vpop.f32.mrf.mxu0
        %v2458 = vadd.f32 %v2297, %v2457
        %v2459 = vpop.f32.mrf.mxu0
        %2460 = vmatprep.mubr.bf16.mxu0 0
        %2461 = vmatmul.mubr.bf16.gmra.mxu0 %v936
        %v2462 = vpop.f32.mrf.mxu0
        %v2463 = vadd.f32 %v2302, %v2462
        %v2464 = vpop.f32.mrf.mxu0
        %v2465 = vpop.f32.mrf.mxu0
        %v2466 = vadd.f32 %v2305, %v2465
        %v2467 = vpop.f32.mrf.mxu0
        %2468 = vmatprep.mubr.bf16.mxu0 0
        %2469 = vmatmul.mubr.bf16.gmra.mxu0 %v939
        %v2470 = vpop.f32.mrf.mxu0
        %v2471 = vadd.f32 %v2310, %v2470
        %v2472 = vpop.f32.mrf.mxu0
        %v2473 = vpop.f32.mrf.mxu0
        %v2474 = vadd.f32 %v2313, %v2473
        %v2475 = vpop.f32.mrf.mxu0
        %2476 = vmatprep.mubr.bf16.mxu0 0
        %2477 = vmatmul.mubr.bf16.gmra.mxu0 %v942
        %v2478 = vpop.f32.mrf.mxu0
        %v2479 = vadd.f32 %v2318, %v2478
        %v2480 = vpop.f32.mrf.mxu0
        %v2481 = vpop.f32.mrf.mxu0
        %v2482 = vadd.f32 %v2321, %v2481
        %v2483 = vpop.f32.mrf.mxu0
        %2484 = vmatprep.mubr.bf16.mxu0 0
        %2485 = vmatmul.mubr.bf16.gmra.mxu0 %v945
        %v2486 = vpop.f32.mrf.mxu0
        %v2487 = vadd.f32 %v2326, %v2486
        %v2488 = vpop.f32.mrf.mxu0
        %v2489 = vpop.f32.mrf.mxu0
        %v2490 = vadd.f32 %v2329, %v2489
        %v2491 = vpop.f32.mrf.mxu0
        %2492 = vmatprep.mubr.bf16.mxu0 0
        %2493 = vmatmul.mubr.bf16.gmra.mxu0 %v948
        %v2494 = vpop.f32.mrf.mxu0
        %v2495 = vadd.f32 %v2334, %v2494
        %v2496 = vpop.f32.mrf.mxu0
        %v2497 = vpop.f32.mrf.mxu0
        %v2498 = vadd.f32 %v2337, %v2497
        %v2499 = vpop.f32.mrf.mxu0
        %2500 = vmatprep.mubr.bf16.mxu0 0
        %2501 = vmatmul.mubr.bf16.gmra.mxu0 %v951
        %v2502 = vpop.f32.mrf.mxu0
        %v2503 = vadd.f32 %v2342, %v2502
        %v2504 = vpop.f32.mrf.mxu0
        %v2505 = vpop.f32.mrf.mxu0
        %v2506 = vadd.f32 %v2345, %v2505
        %v2507 = vpop.f32.mrf.mxu0
        %2508 = vmatprep.mubr.bf16.mxu0 0
        %2509 = vmatmul.mubr.bf16.gmra.mxu0 %v954
        %v2510 = vpop.f32.mrf.mxu0
        %v2511 = vadd.f32 %v2350, %v2510
        %v2512 = vpop.f32.mrf.mxu0
        %v2513 = vpop.f32.mrf.mxu0
        %v2514 = vadd.f32 %v2353, %v2513
        %v2515 = vpop.f32.mrf.mxu0
        %2516 = vmatprep.mubr.bf16.mxu0 0
        %2517 = vmatmul.mubr.bf16.gmra.mxu0 %v1035
        %v2518 = vpop.f32.mrf.mxu0
        %v2519 = vadd.f32 %v2358, %v2518
        %v2520 = vpop.f32.mrf.mxu0
        %v2521 = vpop.f32.mrf.mxu0
        %v2522 = vadd.f32 %v2361, %v2521
        %v2523 = vpop.f32.mrf.mxu0
        %2524 = vmatprep.mubr.bf16.mxu0 0
        %2525 = vmatmul.mubr.bf16.gmra.mxu0 %v954
        %v2526 = vpop.f32.mrf.mxu0
        %v2527 = vadd.f32 %v2366, %v2526
        %v2528 = vpop.f32.mrf.mxu0
        %v2529 = vpop.f32.mrf.mxu0
        %v2530 = vadd.f32 %v2369, %v2529
        %v2531 = vpop.f32.mrf.mxu0
        %2532 = vdwg.mxu0
        %v2533 = vadd.f32 %v1892, %v2407
        %v2534 = vadd.f32 %v1895, %v2410
        %v2535 = vadd.f32 %v1900, %v2415
        %v2536 = vadd.f32 %v1903, %v2418
        %v2537 = vadd.f32 %v1908, %v2423
        %v2538 = vadd.f32 %v1911, %v2426
        %v2539 = vadd.f32 %v1916, %v2431
        %v2540 = vadd.f32 %v1919, %v2434
        %v2541 = vadd.f32 %v1924, %v2439
        %v2542 = vadd.f32 %v1927, %v2442
        %v2543 = vadd.f32 %v1932, %v2447
        %v2544 = vadd.f32 %v1935, %v2450
        %v2545 = vadd.f32 %v1940, %v2455
        %v2546 = vadd.f32 %v1943, %v2458
        %v2547 = vadd.f32 %v1948, %v2463
        %v2548 = vadd.f32 %v1951, %v2466
        %v2549 = vadd.f32 %v1956, %v2471
        %v2550 = vadd.f32 %v1959, %v2474
        %v2551 = vadd.f32 %v1964, %v2479
        %v2552 = vadd.f32 %v1967, %v2482
        %v2553 = vadd.f32 %v1972, %v2487
        %v2554 = vadd.f32 %v1975, %v2490
        %v2555 = vadd.f32 %v1980, %v2495
        %v2556 = vadd.f32 %v1983, %v2498
        %v2557 = vadd.f32 %v1988, %v2503
        %v2558 = vadd.f32 %v1991, %v2506
        %v2559 = vadd.f32 %v1996, %v2511
        %v2560 = vadd.f32 %v1999, %v2514
        %v2561 = vadd.f32 %v2004, %v2519
        %v2562 = vadd.f32 %v2007, %v2522
        %v2563 = vadd.f32 %v2012, %v2527
        %v2564 = vadd.f32 %v2015, %v2530
        %v2565 = vpack.c.bf16 %v2534, %v2533
        %v2566 = vpack.c.bf16 %v2536, %v2535
        %v2567 = vpack.c.bf16 %v2538, %v2537
        %v2568 = vpack.c.bf16 %v2540, %v2539
        %v2569 = vpack.c.bf16 %v2542, %v2541
        %v2570 = vpack.c.bf16 %v2544, %v2543
        %v2571 = vpack.c.bf16 %v2546, %v2545
        %v2572 = vpack.c.bf16 %v2548, %v2547
        %v2573 = vpack.c.bf16 %v2550, %v2549
        %v2574 = vpack.c.bf16 %v2552, %v2551
        %v2575 = vpack.c.bf16 %v2554, %v2553
        %v2576 = vpack.c.bf16 %v2556, %v2555
        %v2577 = vpack.c.bf16 %v2558, %v2557
        %v2578 = vpack.c.bf16 %v2560, %v2559
        %v2579 = vpack.c.bf16 %v2562, %v2561
        %v2580 = vpack.c.bf16 %v2564, %v2563
        %v2597 = vunpack.c.l.b16 %v2565
        %v2598 = vunpack.c.h.b16 %v2565
        %v2599 = vunpack.c.l.b16 %v2566
        %v2600 = vunpack.c.h.b16 %v2566
        %v2601 = vunpack.c.l.b16 %v2567
        %v2602 = vunpack.c.h.b16 %v2567
        %v2603 = vunpack.c.l.b16 %v2568
        %v2604 = vunpack.c.h.b16 %v2568
        %v2605 = vunpack.c.l.b16 %v2569
        %v2606 = vunpack.c.h.b16 %v2569
        %v2607 = vunpack.c.l.b16 %v2570
        %v2608 = vunpack.c.h.b16 %v2570
        %v2609 = vunpack.c.l.b16 %v2571
        %v2610 = vunpack.c.h.b16 %v2571
        %v2611 = vunpack.c.l.b16 %v2572
        %v2612 = vunpack.c.h.b16 %v2572
        %v2613 = vunpack.c.l.b16 %v2573
        %v2614 = vunpack.c.h.b16 %v2573
        %v2615 = vunpack.c.l.b16 %v2574
        %v2616 = vunpack.c.h.b16 %v2574
        %v2617 = vunpack.c.l.b16 %v2575
        %v2618 = vunpack.c.h.b16 %v2575
        %v2619 = vunpack.c.l.b16 %v2576
        %v2620 = vunpack.c.h.b16 %v2576
        %v2621 = vunpack.c.l.b16 %v2577
        %v2622 = vunpack.c.h.b16 %v2577
        %v2623 = vunpack.c.l.b16 %v2578
        %v2624 = vunpack.c.h.b16 %v2578
        %v2625 = vunpack.c.l.b16 %v2579
        %v2626 = vunpack.c.h.b16 %v2579
        %v2627 = vunpack.c.l.b16 %v2580
        %v2628 = vunpack.c.h.b16 %v2580
        %v2629 = vpack.c.b16 %v2597, %v2597
        %v2630 = vpack.c.b16 %v2598, %v2598
        %v2631 = vpack.c.b16 %v2599, %v2599
        %v2632 = vpack.c.b16 %v2600, %v2600
        %v2633 = vpack.c.b16 %v2601, %v2601
        %v2634 = vpack.c.b16 %v2602, %v2602
        %v2635 = vpack.c.b16 %v2603, %v2603
        %v2636 = vpack.c.b16 %v2604, %v2604
        %v2637 = vpack.c.b16 %v2605, %v2605
        %v2638 = vpack.c.b16 %v2606, %v2606
        %v2639 = vpack.c.b16 %v2607, %v2607
        %v2640 = vpack.c.b16 %v2608, %v2608
        %v2641 = vpack.c.b16 %v2609, %v2609
        %v2642 = vpack.c.b16 %v2610, %v2610
        %v2643 = vpack.c.b16 %v2611, %v2611
        %v2644 = vpack.c.b16 %v2612, %v2612
        %v2645 = vpack.c.b16 %v2613, %v2613
        %v2646 = vpack.c.b16 %v2614, %v2614
        %v2647 = vpack.c.b16 %v2615, %v2615
        %v2648 = vpack.c.b16 %v2616, %v2616
        %v2649 = vpack.c.b16 %v2617, %v2617
        %v2650 = vpack.c.b16 %v2618, %v2618
        %v2651 = vpack.c.b16 %v2619, %v2619
        %v2652 = vpack.c.b16 %v2620, %v2620
        %v2653 = vpack.c.b16 %v2621, %v2621
        %v2654 = vpack.c.b16 %v2622, %v2622
        %v2655 = vpack.c.b16 %v2623, %v2623
        %v2656 = vpack.c.b16 %v2624, %v2624
        %v2657 = vpack.c.b16 %v2625, %v2625
        %v2658 = vpack.c.b16 %v2626, %v2626
        %v2659 = vpack.c.b16 %v2627, %v2627
        %v2660 = vpack.c.b16 %v2628, %v2628
        %2693 = vst [vmem:[%s207] sm:$0xf] %v2629
        %2694 = vst [vmem:[%s207 + $0x4] sm:$0xf] %v2630
        %2695 = vst [vmem:[%s207 + $0x8] sm:$0xf] %v2631
        %2696 = vst [vmem:[%s207 + $0xc] sm:$0xf] %v2632
        %2697 = vst [vmem:[%s207 + $0x10] sm:$0xf] %v2633
        %2698 = vst [vmem:[%s207 + $0x14] sm:$0xf] %v2634
        %2699 = vst [vmem:[%s207 + $0x18] sm:$0xf] %v2635
        %2700 = vst [vmem:[%s207 + $0x1c] sm:$0xf] %v2636
        %2701 = vst [vmem:[%s207 + $0x20] sm:$0xf] %v2637
        %2702 = vst [vmem:[%s207 + $0x24] sm:$0xf] %v2638
        %2703 = vst [vmem:[%s207 + $0x28] sm:$0xf] %v2639
        %2704 = vst [vmem:[%s207 + $0x2c] sm:$0xf] %v2640
        %2705 = vst [vmem:[%s207 + $0x30] sm:$0xf] %v2641
        %2706 = vst [vmem:[%s207 + $0x34] sm:$0xf] %v2642
        %2707 = vst [vmem:[%s207 + $0x38] sm:$0xf] %v2643
        %2708 = vst [vmem:[%s207 + $0x3c] sm:$0xf] %v2644
        %2709 = vst [vmem:[%s207 + $0x40] sm:$0xf] %v2645
        %2710 = vst [vmem:[%s207 + $0x44] sm:$0xf] %v2646
        %2711 = vst [vmem:[%s207 + $0x48] sm:$0xf] %v2647
        %2712 = vst [vmem:[%s207 + $0x4c] sm:$0xf] %v2648
        %2713 = vst [vmem:[%s207 + $0x50] sm:$0xf] %v2649
        %2714 = vst [vmem:[%s207 + $0x54] sm:$0xf] %v2650
        %2715 = vst [vmem:[%s207 + $0x58] sm:$0xf] %v2651
        %2716 = vst [vmem:[%s207 + $0x5c] sm:$0xf] %v2652
        %2717 = vst [vmem:[%s207 + $0x60] sm:$0xf] %v2653
        %2718 = vst [vmem:[%s207 + $0x64] sm:$0xf] %v2654
        %2719 = vst [vmem:[%s207 + $0x68] sm:$0xf] %v2655
        %2720 = vst [vmem:[%s207 + $0x6c] sm:$0xf] %v2656
        %2721 = vst [vmem:[%s207 + $0x70] sm:$0xf] %v2657
        %2722 = vst [vmem:[%s207 + $0x74] sm:$0xf] %v2658
        %2723 = vst [vmem:[%s207 + $0x78] sm:$0xf] %v2659
        %2724 = vst [vmem:[%s207 + $0x7c] sm:$0xf] %v2660
        %v2725 = vadd.f32 %v2533, %v2534
        %v2726 = vadd.f32 %v2725, %v2535
        %v2727 = vadd.f32 %v2726, %v2536
        %v2728 = vadd.f32 %v2727, %v2537
        %v2729 = vadd.f32 %v2728, %v2538
        %v2730 = vadd.f32 %v2729, %v2539
        %v2731 = vadd.f32 %v2730, %v2540
        %v2732 = vadd.f32 %v2731, %v2541
        %v2733 = vadd.f32 %v2732, %v2542
        %v2734 = vadd.f32 %v2733, %v2543
        %v2735 = vadd.f32 %v2734, %v2544
        %v2736 = vadd.f32 %v2735, %v2545
        %v2737 = vadd.f32 %v2736, %v2546
        %v2738 = vadd.f32 %v2737, %v2547
        %v2739 = vadd.f32 %v2738, %v2548
        %v2740 = vadd.f32 %v2739, %v2549
        %v2741 = vadd.f32 %v2740, %v2550
        %v2742 = vadd.f32 %v2741, %v2551
        %v2743 = vadd.f32 %v2742, %v2552
        %v2744 = vadd.f32 %v2743, %v2553
        %v2745 = vadd.f32 %v2744, %v2554
        %v2746 = vadd.f32 %v2745, %v2555
        %v2747 = vadd.f32 %v2746, %v2556
        %v2748 = vadd.f32 %v2747, %v2557
        %v2749 = vadd.f32 %v2748, %v2558
        %v2750 = vadd.f32 %v2749, %v2559
        %v2751 = vadd.f32 %v2750, %v2560
        %v2752 = vadd.f32 %v2751, %v2561
        %v2753 = vadd.f32 %v2752, %v2562
        %v2754 = vadd.f32 %v2753, %v2563
        %v2755 = vadd.f32 %v2754, %v2564
        %v2756 = vrot.slane %v2755, 4
        %v2757 = vadd.f32 %v2755, %v2756
        %v2758 = vrot.slane %v2757, 2
        %v2759 = vadd.f32 %v2757, %v2758
        %v2760 = vrot.slane %v2759, 1
        %v2761 = vadd.f32 %v2759, %v2760
        %v2762 = vmul.f32 %v2533, %v2533
        %v2763 = vmul.f32 %v2534, %v2534
        %v2764 = vmul.f32 %v2535, %v2535
        %v2765 = vmul.f32 %v2536, %v2536
        %v2766 = vmul.f32 %v2537, %v2537
        %v2767 = vmul.f32 %v2538, %v2538
        %v2768 = vmul.f32 %v2539, %v2539
        %v2769 = vmul.f32 %v2540, %v2540
        %v2770 = vmul.f32 %v2541, %v2541
        %v2771 = vmul.f32 %v2542, %v2542
        %v2772 = vmul.f32 %v2543, %v2543
        %v2773 = vmul.f32 %v2544, %v2544
        %v2774 = vmul.f32 %v2545, %v2545
        %v2775 = vmul.f32 %v2546, %v2546
        %v2776 = vmul.f32 %v2547, %v2547
        %v2777 = vmul.f32 %v2548, %v2548
        %v2778 = vmul.f32 %v2549, %v2549
        %v2779 = vmul.f32 %v2550, %v2550
        %v2780 = vmul.f32 %v2551, %v2551
        %v2781 = vmul.f32 %v2552, %v2552
        %v2782 = vmul.f32 %v2553, %v2553
        %v2783 = vmul.f32 %v2554, %v2554
        %v2784 = vmul.f32 %v2555, %v2555
        %v2785 = vmul.f32 %v2556, %v2556
        %v2786 = vmul.f32 %v2557, %v2557
        %v2787 = vmul.f32 %v2558, %v2558
        %v2788 = vmul.f32 %v2559, %v2559
        %v2789 = vmul.f32 %v2560, %v2560
        %v2790 = vmul.f32 %v2561, %v2561
        %v2791 = vmul.f32 %v2562, %v2562
        %v2792 = vmul.f32 %v2563, %v2563
        %v2793 = vmul.f32 %v2564, %v2564
        %v2794 = vadd.f32 %v2762, %v2763
        %v2795 = vadd.f32 %v2794, %v2764
        %v2796 = vadd.f32 %v2795, %v2765
        %v2797 = vadd.f32 %v2796, %v2766
        %v2798 = vadd.f32 %v2797, %v2767
        %v2799 = vadd.f32 %v2798, %v2768
        %v2800 = vadd.f32 %v2799, %v2769
        %v2801 = vadd.f32 %v2800, %v2770
        %v2802 = vadd.f32 %v2801, %v2771
        %v2803 = vadd.f32 %v2802, %v2772
        %v2804 = vadd.f32 %v2803, %v2773
        %v2805 = vadd.f32 %v2804, %v2774
        %v2806 = vadd.f32 %v2805, %v2775
        %v2807 = vadd.f32 %v2806, %v2776
        %v2808 = vadd.f32 %v2807, %v2777
        %v2809 = vadd.f32 %v2808, %v2778
        %v2810 = vadd.f32 %v2809, %v2779
        %v2811 = vadd.f32 %v2810, %v2780
        %v2812 = vadd.f32 %v2811, %v2781
        %v2813 = vadd.f32 %v2812, %v2782
        %v2814 = vadd.f32 %v2813, %v2783
        %v2815 = vadd.f32 %v2814, %v2784
        %v2816 = vadd.f32 %v2815, %v2785
        %v2817 = vadd.f32 %v2816, %v2786
        %v2818 = vadd.f32 %v2817, %v2787
        %v2819 = vadd.f32 %v2818, %v2788
        %v2820 = vadd.f32 %v2819, %v2789
        %v2821 = vadd.f32 %v2820, %v2790
        %v2822 = vadd.f32 %v2821, %v2791
        %v2823 = vadd.f32 %v2822, %v2792
        %v2824 = vadd.f32 %v2823, %v2793
        %v2825 = vrot.slane %v2824, 4
        %v2826 = vadd.f32 %v2824, %v2825
        %v2827 = vrot.slane %v2826, 2
        %v2828 = vadd.f32 %v2826, %v2827
        %v2829 = vrot.slane %v2828, 1
        %v2830 = vadd.f32 %v2828, %v2829
        %vm2831 = vcmask 1040384
        %v2832 = vsel %vm2831, %v2761, %v2830
        %2833 = vst [vmem:[%s214] sm:$0x3] %v2832
        %s2834 = sand.u32 %s80, 1
        %s2835 = scalar_lea.sflag [#allocation4], %s2834
        %s2836 = sand.u32 %s80, 1
        %s2837 = smul.addr %s2836, 128
        %s2838 = scalar_lea.vmem [#allocation7], %s2837
        %s2839 = sand.u32 %s106, 1
        %s2840 = scalar_lea.sflag [#allocation9], %s2839
        %s2841 = sand.u32 %s106, 1
        %s2842 = smul.addr %s2841, 2
        %s2843 = scalar_lea.vmem [#allocation8], %s2842
        // Predicated region
        $region37: #{tpu_custom_call.1} parent=27 // pred_check
          %p2844 = pneg %p90
        $region38: #{tpu_custom_call.1} parent=27 // pred_check_branch
          %2846 = sbr.rel (%p2844) target = $region40
        $region39: #{tpu_custom_call.1} parent=27 // pred_region
          %s2848 = ssub.s32 2048, 2048
          %2849 = vsyncadd %s2835, %s2848
          %s2850 = smul.addr %s25, 32
          %s2851 = smul.addr %s2850, 64
          %s2852 = scalar_lea.hbm %s2, %s2851
          %s2853 = sshll.u32 %s2838, 4
          %s2854 = int_to_ptr.vmem [resolvable:$true] %s2853
          %2859 = dma.vmem_to_hbm [thread:$0]  %s2854, 2048, %s2852, %s2835, 64, 64, 4
        $region40: #{tpu_custom_call.1} parent=27 // pred_fallthru
          _
        // Predicated region
        $region41: #{tpu_custom_call.1} parent=27 // pred_check
          %p2860 = pneg %p116
        $region42: #{tpu_custom_call.1} parent=27 // pred_check_branch
          %2862 = sbr.rel (%p2860) target = $region44
        $region43: #{tpu_custom_call.1} parent=27 // pred_region
          %s2864 = ssub.s32 32, 32
          %2865 = vsyncadd %s2840, %s2864
          %s2866 = smul.addr %s25, 32
          %s2867 = scalar_lea.hbm %s3, %s2866
          %s2869 = sshll.u32 %s2843, 4
          %s2870 = int_to_ptr.vmem [resolvable:$true] %s2869
          %2872 = dma.vmem_to_hbm [thread:$0]  %s2870, 32, %s2867, %s2840
        $region44: #{tpu_custom_call.1} parent=27 // pred_fallthru
          _
      $region28: #{tpu_custom_call.1} parent=5 // pred_fallthru
        _
      %p2873 = scmp.le.s32.totalorder 2, %s20
      // Predicated region
      $region45: #{tpu_custom_call.1} parent=5 // pred_check
        %p2874 = pneg %p2873
      $region46: #{tpu_custom_call.1} parent=5 // pred_check_branch
        %2876 = sbr.rel (%p2874) target = $region48
      $region47: #{tpu_custom_call.1} parent=5 // pred_region
        %s2877 = ssub.s32 %s20, 2
        // Predicated region
        $region49: #{tpu_custom_call.1} parent=47 // pred_check
          %p2878 = pneg %p96
        $region50: #{tpu_custom_call.1} parent=47 // pred_check_branch
          %2880 = sbr.rel (%p2878) target = $region52
        $region51: #{tpu_custom_call.1} parent=47 // pred_region
          %s2881 = sand.u32 %s81, 1
          %s2882 = scalar_lea.sflag [#allocation4], %s2881
          %s2883 = sand.u32 %s81, 1
          %s2884 = smul.addr %s2883, 128
          %s2885 = scalar_lea.vmem [#allocation7], %s2884
          %2886 = dma.done %s2882, 2048
        $region52: #{tpu_custom_call.1} parent=47 // pred_fallthru
          _
        // Predicated region
        $region53: #{tpu_custom_call.1} parent=47 // pred_check
          %p2887 = pneg %p122
        $region54: #{tpu_custom_call.1} parent=47 // pred_check_branch
          %2889 = sbr.rel (%p2887) target = $region56
        $region55: #{tpu_custom_call.1} parent=47 // pred_region
          %s2890 = sand.u32 %s107, 1
          %s2891 = scalar_lea.sflag [#allocation9], %s2890
          %s2892 = sand.u32 %s107, 1
          %s2893 = smul.addr %s2892, 2
          %s2894 = scalar_lea.vmem [#allocation8], %s2893
          %2895 = dma.done %s2891, 32
        $region56: #{tpu_custom_call.1} parent=47 // pred_fallthru
          _
      $region48: #{tpu_custom_call.1} parent=5 // pred_fallthru
        _
    $region6: #{tpu_custom_call.1} parent=1 // loop_footer
      %s24 = sadd.s32 1, %s20
    $region7: #{tpu_custom_call.1} parent=1 // loop_footer_branch
      %19 = sbr.rel target = $region3
    $region8: #{tpu_custom_call.1} parent=1 // loop_exit
      _
    %2896 = vsyncpa [#allocation3], 1
    %s2897 = scalar_lea.sflag [#allocation3], 1
    %2898 = vsyncpa %s2897, 1
    %2899 = vsyncpa [#allocation6], 1
    %2900 = vsyncpa [#allocation4], 1
    %s2901 = scalar_lea.sflag [#allocation4], 1
    %2902 = vsyncpa %s2901, 1
    %2903 = vsyncpa [#allocation9], 1
    %s2904 = scalar_lea.sflag [#allocation9], 1
    %2905 = vsyncpa %s2904, 1

</llo_original>
